<compile_context>
chip_gen: v5e
topology: v5e:2x2
jax: 0.10.0
libtpu: 0.0.40
codegen_flags: <defaults>
</compile_context>

<pallas_src>
import functools

import jax
import jax.numpy as jnp
from jax.experimental import pallas as pl
from jax.experimental.pallas import tpu as pltpu


def _round_up(a, m):
    return (a + m - 1) // m * m


def _kan_fused_kernel(x_ref, *refs, knots, degree, num_bases, domain, layer_dims):
    """All KAN layers for one batch tile; batch sits on the lane axis.

    refs = (coefT_0, ..., coefT_{L-1}, out_ref, phi_scratch)
      coefT_l : (d_out_l, num_bases * d_in_pad_l); column k*d_in_pad + i holds
                mask[j] * coef[k, i, j]; padding columns (i >= d_in) are zero.
      x_ref   : (d_in_0, TB)           out_ref : (d_out_final, TB)
      phi_scratch : (K_pad_max, TB) f32 VMEM.
    """
    num_layers = len(layer_dims)
    coef_refs = refs[:num_layers]
    out_ref = refs[num_layers]
    phi_ref = refs[num_layers + 1]

    d0, d1 = domain
    inv_dom = 1.0 / (d1 - d0)                   # trace-time constant: multiply, not divide
    nk = len(knots)                             # num_bases + degree + 1
    h = (knots[-1] - knots[0]) / (nk - 1)       # uniform knot spacing (trace-time float)

    # VMEM scratch is uninitialized; its padding rows feed the dot (against zero coef
    # columns) so they must at least be finite.  Zero it unconditionally each grid step
    # (a handful of vreg stores) — safe under megacore "parallel" sharding, unlike a
    # program_id()==0 guard.
    phi_ref[...] = jnp.zeros_like(phi_ref)

    act = x_ref[...].astype(jnp.float32)        # (d_in0, TB), batch lane-dense
    for l, (d_in, d_out, d_in_pad) in enumerate(layer_dims):
        coef_ref = coef_refs[l]

        xn = (act - d0) * inv_dom               # normalize to the spline domain

        # Degree-0 half-open interval indicators as step-function differences.
        steps = [(xn >= knots[m]).astype(jnp.float32) for m in range(nk)]
        basis = [steps[m] - steps[m + 1] for m in range(nk - 1)]

        # Cox-de Boor recursion; uniform knots => every level-d span equals d*h, so both
        # weights share one affine map of xn and every divide is a trace-time constant.
        u = xn - knots[0]
        for d in range(1, degree + 1):
            inv_span = 1.0 / (d * h)
            t = u * inv_span
            new_basis = []
            for k in range(nk - 1 - d):
                cl = (knots[k] - knots[0]) * inv_span
                cr = (knots[k + d + 1] - knots[0]) * inv_span
                new_basis.append((t - cl) * basis[k] + (cr - t) * basis[k + 1])
            basis = new_basis
        # `basis` now holds num_bases slabs of shape (d_in, TB)

        # Assemble phi k-major at 8-aligned sublane offsets in VMEM scratch.
        for k in range(num_bases):
            phi_ref[k * d_in_pad:k * d_in_pad + d_in, :] = basis[k]

        # One MXU dot per layer: (d_out, K_pad) @ (K_pad, TB) -> (d_out, TB).
        k_pad = num_bases * d_in_pad
        phi = phi_ref[0:k_pad, :].astype(coef_ref.dtype)
        act = jnp.dot(coef_ref[...], phi, preferred_element_type=jnp.float32)

    out_ref[...] = act.astype(out_ref.dtype)


def kan_forward(x, params, *, knots, degree, domain, tb=512, mxu_dtype=jnp.float32):
    """Fused KAN forward.

    x: (B, D_in) f32.  params: list of (coef (num_bases, d_in, d_out) f32, mask (1, d_out) f32).
    Returns squeeze of (B, d_out_final), matching `activations.squeeze()` in the reference.
    """
    x = jnp.asarray(x, jnp.float32)
    B, d_in0 = x.shape
    num_bases = params[0][0].shape[0]
    d_out_final = params[-1][0].shape[-1]

    # --- layout plumbing only (no compute hoisted): fold the pruning mask, transpose to
    # (d_out, k, i) so batch can sit on lanes in-kernel, zero-pad i up to 8 sublanes.
    coef_flats, layer_dims = [], []
    d_prev = d_in0
    for coef, mask in params:
        nb, d_in, d_out = coef.shape
        assert nb == num_bases and d_in == d_prev, (coef.shape, d_prev)
        d_in_pad = _round_up(d_in, 8)
        cm = coef * mask.reshape(1, 1, d_out)                     # fold pruning mask
        ct = jnp.transpose(cm, (2, 0, 1))                         # (d_out, nb, d_in)
        ct = jnp.pad(ct, ((0, 0), (0, 0), (0, d_in_pad - d_in)))  # zero pad columns
        coef_flats.append(ct.reshape(d_out, nb * d_in_pad).astype(mxu_dtype))
        layer_dims.append((d_in, d_out, d_in_pad))
        d_prev = d_out
    k_pad_max = max(num_bases * dp for (_, _, dp) in layer_dims)

    # --- batch tiling: batch on the lane axis; tile is a multiple of 128 when tiled.
    x_t = x.T                                                     # (d_in0, B)
    if B > tb:
        assert tb % 128 == 0, "batch tile must be a multiple of 128"
        TB = tb
        n_tiles = pl.cdiv(B, TB)
        b_pad = n_tiles * TB
        if b_pad != B:
            x_t = jnp.pad(x_t, ((0, 0), (0, b_pad - B)))          # pad rows sliced off below
    else:
        TB, n_tiles, b_pad = B, 1, B

    in_specs = [pl.BlockSpec((d_in0, TB), lambda i: (0, i))]      # pipelined batch tiles
    for cf in coef_flats:
        in_specs.append(pl.BlockSpec(cf.shape, lambda i: (0, 0)))  # VMEM-resident weights
    out_specs = pl.BlockSpec((d_out_final, TB), lambda i: (0, i))

    kernel = functools.partial(
        _kan_fused_kernel,
        knots=tuple(float(k) for k in knots), degree=degree, num_bases=num_bases,
        domain=(float(domain[0]), float(domain[1])), layer_dims=tuple(layer_dims))

    out_t = pl.pallas_call(
        kernel,
        out_shape=jax.ShapeDtypeStruct((d_out_final, b_pad), jnp.float32),
        grid=(n_tiles,),
        in_specs=in_specs,
        out_specs=out_specs,
        scratch_shapes=[pltpu.VMEM((k_pad_max, TB), jnp.float32)],
        compiler_params=pltpu.CompilerParams(
            dimension_semantics=("parallel",),        # v7x: shard batch tiles over 2 TCs
            vmem_limit_bytes=32 * 1024 * 1024,        # explicit limit; fits v7x's 64 MiB
        ),
    )(x_t, *coef_flats)

    out = out_t[:, :B].T                              # (B, d_out_final)
    return jnp.squeeze(out)                           # matches activations.squeeze()


def kan_forward_ref(x, params, *, knots, degree, domain):
    """Pure-jnp reference (standard Cox-de Boor with per-knot differences — the recursion
    the buggy PyTorch bspline_basis intends; degree-0 semantics match exactly)."""
    act = jnp.asarray(x, jnp.float32)
    knots = [float(k) for k in knots]
    nk = len(knots)
    for coef, mask in params:
        xn = (act - domain[0]) / (domain[1] - domain[0])
        basis = [((xn >= knots[m]) & (xn < knots[m + 1])).astype(jnp.float32)
                 for m in range(nk - 1)]
        for d in range(1, degree + 1):
            basis = [
                ((xn - knots[k]) / (knots[k + d] - knots[k])) * basis[k]
                + ((knots[k + d + 1] - xn) / (knots[k + d + 1] - knots[k + 1])) * basis[k + 1]
                for k in range(nk - 1 - d)
            ]
        phi = jnp.stack(basis, axis=-1)               # (B, d_in, num_bases)
        act = jnp.einsum('bik,kij->bj', phi, coef) * mask[0]
    return jnp.squeeze(act)


if __name__ == "__main__":
    key = jax.random.PRNGKey(0)

    # Module hyper-parameters (small, consistent with KAN.__init__)
    input_dim = 4
    hidden_widths = [8, 6, 1]
    num_bases = 6
    degree = 3
    domain = (0.0, 1.0)

    nknots = num_bases + degree + 1
    knots = tuple(domain[0] + i * (domain[1] - domain[0]) / (nknots - 1)
                  for i in range(nknots))             # torch.linspace, baked as constants

    keys = jax.random.split(key, len(hidden_widths) + 2)

    # Deterministic params.  Coefficients per edge ~ U(0, 1/d_in) so intermediate
    # activations stay inside the spline domain [0, 1) and deeper layers stay non-trivial.
    params = []
    d_prev = input_dim
    for li, d_out in enumerate(hidden_widths):
        coef = jax.random.uniform(keys[li + 1], (num_bases, d_prev, d_out),
                                  jnp.float32, 0.0, 1.0 / d_prev)
        mask = jnp.ones((1, d_out), jnp.float32)      # pruning_mask (ones, as in __init__)
        params.append((coef, mask))
        d_prev = d_out

    # Exercise both paths: batch-tiled grid with padding (300 -> 3 tiles of 128, sliced
    # back to 300) and the small single-tile path (TB == B).
    for batch, tb in ((300, 128), (8, 128)):
        xk = jax.random.fold_in(keys[0], batch)
        x = jax.random.uniform(xk, (batch, input_dim), jnp.float32, 0.0, 1.0)

        out = jax.block_until_ready(
            kan_forward(x, params, knots=knots, degree=degree, domain=domain, tb=tb))
        ref = kan_forward_ref(x, params, knots=knots, degree=degree, domain=domain)

        assert out.shape == ref.shape, (out.shape, ref.shape)
        assert jnp.allclose(out, ref, atol=1e-3, rtol=1e-3), (
            "max abs diff", float(jnp.max(jnp.abs(out - ref))))

    print("KERNEL_OK")
</pallas_src>

<mosaic_0001>
module attributes {stable_mosaic.version = 11 : i64} {
  func.func @_kan_fused_kernel(%arg0: i32, %arg1: memref<4x128xf32, #tpu.memory_space<vmem>>, %arg2: memref<8x48xf32, #tpu.memory_space<vmem>>, %arg3: memref<6x48xf32, #tpu.memory_space<vmem>>, %arg4: memref<1x48xf32, #tpu.memory_space<vmem>>, %arg5: memref<1x128xf32, #tpu.memory_space<vmem>>, %arg6: memref<48x128xf32, #tpu.memory_space<vmem>>) attributes {dimension_semantics = [#tpu.dimension_semantics<parallel>], iteration_bounds = array<i64: 3>, scalar_prefetch = 0 : i64, scratch_operands = 1 : i64, tpu.core_type = #tpu.core_type<tc>, window_params = [{transform_indices = @transform_0, window_bounds = array<i64: 4, 128>}, {pipeline_mode = #tpu.pipeline_mode<synchronous>, transform_indices = @transform_1, window_bounds = array<i64: 8, 48>}, {pipeline_mode = #tpu.pipeline_mode<synchronous>, transform_indices = @transform_2, window_bounds = array<i64: 6, 48>}, {pipeline_mode = #tpu.pipeline_mode<synchronous>, transform_indices = @transform_3, window_bounds = array<i64: 1, 48>}, {transform_indices = @transform_4, window_bounds = array<i64: 1, 128>}]} {
    %cst = arith.constant 0.000000e+00 : f32
    %0 = vector.broadcast %cst : f32 to vector<48x128xf32>
    %c0 = arith.constant 0 : index
    %c0_0 = arith.constant 0 : index
    %1 = vector.load %arg6[%c0, %c0_0] : memref<48x128xf32, #tpu.memory_space<vmem>>, vector<48x128xf32>
    tpu.vector_store %arg6[%c0, %c0_0], %0 {strides = array<i32>} : memref<48x128xf32, #tpu.memory_space<vmem>>, vector<48x128xf32>,
    %c0_1 = arith.constant 0 : index
    %c0_2 = arith.constant 0 : index
    %2 = vector.load %arg1[%c0_1, %c0_2] : memref<4x128xf32, #tpu.memory_space<vmem>>, vector<4x128xf32>
    %cst_3 = arith.constant 0.000000e+00 : f32
    %3 = vector.broadcast %cst_3 : f32 to vector<4x128xf32>
    %4 = arith.subf %2, %3 : vector<4x128xf32>
    %cst_4 = arith.constant 1.000000e+00 : f32
    %5 = vector.broadcast %cst_4 : f32 to vector<4x128xf32>
    %6 = arith.mulf %4, %5 : vector<4x128xf32>
    %cst_5 = arith.constant 0.000000e+00 : f32
    %7 = vector.broadcast %cst_5 : f32 to vector<4x128xf32>
    %8 = arith.cmpf oge, %6, %7 : vector<4x128xf32>
    %9 = arith.extui %8 : vector<4x128xi1> to vector<4x128xi32>
    %10 = arith.sitofp %9 : vector<4x128xi32> to vector<4x128xf32>
    %cst_6 = arith.constant 0.111111112 : f32
    %11 = vector.broadcast %cst_6 : f32 to vector<4x128xf32>
    %12 = arith.cmpf oge, %6, %11 : vector<4x128xf32>
    %13 = arith.extui %12 : vector<4x128xi1> to vector<4x128xi32>
    %14 = arith.sitofp %13 : vector<4x128xi32> to vector<4x128xf32>
    %cst_7 = arith.constant 0.222222224 : f32
    %15 = vector.broadcast %cst_7 : f32 to vector<4x128xf32>
    %16 = arith.cmpf oge, %6, %15 : vector<4x128xf32>
    %17 = arith.extui %16 : vector<4x128xi1> to vector<4x128xi32>
    %18 = arith.sitofp %17 : vector<4x128xi32> to vector<4x128xf32>
    %cst_8 = arith.constant 0.333333343 : f32
    %19 = vector.broadcast %cst_8 : f32 to vector<4x128xf32>
    %20 = arith.cmpf oge, %6, %19 : vector<4x128xf32>
    %21 = arith.extui %20 : vector<4x128xi1> to vector<4x128xi32>
    %22 = arith.sitofp %21 : vector<4x128xi32> to vector<4x128xf32>
    %cst_9 = arith.constant 0.444444448 : f32
    %23 = vector.broadcast %cst_9 : f32 to vector<4x128xf32>
    %24 = arith.cmpf oge, %6, %23 : vector<4x128xf32>
    %25 = arith.extui %24 : vector<4x128xi1> to vector<4x128xi32>
    %26 = arith.sitofp %25 : vector<4x128xi32> to vector<4x128xf32>
    %cst_10 = arith.constant 0.555555582 : f32
    %27 = vector.broadcast %cst_10 : f32 to vector<4x128xf32>
    %28 = arith.cmpf oge, %6, %27 : vector<4x128xf32>
    %29 = arith.extui %28 : vector<4x128xi1> to vector<4x128xi32>
    %30 = arith.sitofp %29 : vector<4x128xi32> to vector<4x128xf32>
    %cst_11 = arith.constant 0.666666686 : f32
    %31 = vector.broadcast %cst_11 : f32 to vector<4x128xf32>
    %32 = arith.cmpf oge, %6, %31 : vector<4x128xf32>
    %33 = arith.extui %32 : vector<4x128xi1> to vector<4x128xi32>
    %34 = arith.sitofp %33 : vector<4x128xi32> to vector<4x128xf32>
    %cst_12 = arith.constant 0.777777791 : f32
    %35 = vector.broadcast %cst_12 : f32 to vector<4x128xf32>
    %36 = arith.cmpf oge, %6, %35 : vector<4x128xf32>
    %37 = arith.extui %36 : vector<4x128xi1> to vector<4x128xi32>
    %38 = arith.sitofp %37 : vector<4x128xi32> to vector<4x128xf32>
    %cst_13 = arith.constant 0.888888895 : f32
    %39 = vector.broadcast %cst_13 : f32 to vector<4x128xf32>
    %40 = arith.cmpf oge, %6, %39 : vector<4x128xf32>
    %41 = arith.extui %40 : vector<4x128xi1> to vector<4x128xi32>
    %42 = arith.sitofp %41 : vector<4x128xi32> to vector<4x128xf32>
    %cst_14 = arith.constant 1.000000e+00 : f32
    %43 = vector.broadcast %cst_14 : f32 to vector<4x128xf32>
    %44 = arith.cmpf oge, %6, %43 : vector<4x128xf32>
    %45 = arith.extui %44 : vector<4x128xi1> to vector<4x128xi32>
    %46 = arith.sitofp %45 : vector<4x128xi32> to vector<4x128xf32>
    %47 = arith.subf %10, %14 : vector<4x128xf32>
    %48 = arith.subf %14, %18 : vector<4x128xf32>
    %49 = arith.subf %18, %22 : vector<4x128xf32>
    %50 = arith.subf %22, %26 : vector<4x128xf32>
    %51 = arith.subf %26, %30 : vector<4x128xf32>
    %52 = arith.subf %30, %34 : vector<4x128xf32>
    %53 = arith.subf %34, %38 : vector<4x128xf32>
    %54 = arith.subf %38, %42 : vector<4x128xf32>
    %55 = arith.subf %42, %46 : vector<4x128xf32>
    %cst_15 = arith.constant 0.000000e+00 : f32
    %56 = vector.broadcast %cst_15 : f32 to vector<4x128xf32>
    %57 = arith.subf %6, %56 : vector<4x128xf32>
    %cst_16 = arith.constant 9.000000e+00 : f32
    %58 = vector.broadcast %cst_16 : f32 to vector<4x128xf32>
    %59 = arith.mulf %57, %58 : vector<4x128xf32>
    %cst_17 = arith.constant 0.000000e+00 : f32
    %60 = vector.broadcast %cst_17 : f32 to vector<4x128xf32>
    %61 = arith.subf %59, %60 : vector<4x128xf32>
    %62 = arith.mulf %61, %47 : vector<4x128xf32>
    %cst_18 = arith.constant 2.000000e+00 : f32
    %63 = vector.broadcast %cst_18 : f32 to vector<4x128xf32>
    %64 = arith.subf %63, %59 : vector<4x128xf32>
    %65 = arith.mulf %64, %48 : vector<4x128xf32>
    %66 = arith.addf %62, %65 : vector<4x128xf32>
    %cst_19 = arith.constant 1.000000e+00 : f32
    %67 = vector.broadcast %cst_19 : f32 to vector<4x128xf32>
    %68 = arith.subf %59, %67 : vector<4x128xf32>
    %69 = arith.mulf %68, %48 : vector<4x128xf32>
    %cst_20 = arith.constant 3.000000e+00 : f32
    %70 = vector.broadcast %cst_20 : f32 to vector<4x128xf32>
    %71 = arith.subf %70, %59 : vector<4x128xf32>
    %72 = arith.mulf %71, %49 : vector<4x128xf32>
    %73 = arith.addf %69, %72 : vector<4x128xf32>
    %cst_21 = arith.constant 2.000000e+00 : f32
    %74 = vector.broadcast %cst_21 : f32 to vector<4x128xf32>
    %75 = arith.subf %59, %74 : vector<4x128xf32>
    %76 = arith.mulf %75, %49 : vector<4x128xf32>
    %cst_22 = arith.constant 4.000000e+00 : f32
    %77 = vector.broadcast %cst_22 : f32 to vector<4x128xf32>
    %78 = arith.subf %77, %59 : vector<4x128xf32>
    %79 = arith.mulf %78, %50 : vector<4x128xf32>
    %80 = arith.addf %76, %79 : vector<4x128xf32>
    %cst_23 = arith.constant 3.000000e+00 : f32
    %81 = vector.broadcast %cst_23 : f32 to vector<4x128xf32>
    %82 = arith.subf %59, %81 : vector<4x128xf32>
    %83 = arith.mulf %82, %50 : vector<4x128xf32>
    %cst_24 = arith.constant 5.000000e+00 : f32
    %84 = vector.broadcast %cst_24 : f32 to vector<4x128xf32>
    %85 = arith.subf %84, %59 : vector<4x128xf32>
    %86 = arith.mulf %85, %51 : vector<4x128xf32>
    %87 = arith.addf %83, %86 : vector<4x128xf32>
    %cst_25 = arith.constant 4.000000e+00 : f32
    %88 = vector.broadcast %cst_25 : f32 to vector<4x128xf32>
    %89 = arith.subf %59, %88 : vector<4x128xf32>
    %90 = arith.mulf %89, %51 : vector<4x128xf32>
    %cst_26 = arith.constant 6.000000e+00 : f32
    %91 = vector.broadcast %cst_26 : f32 to vector<4x128xf32>
    %92 = arith.subf %91, %59 : vector<4x128xf32>
    %93 = arith.mulf %92, %52 : vector<4x128xf32>
    %94 = arith.addf %90, %93 : vector<4x128xf32>
    %cst_27 = arith.constant 5.000000e+00 : f32
    %95 = vector.broadcast %cst_27 : f32 to vector<4x128xf32>
    %96 = arith.subf %59, %95 : vector<4x128xf32>
    %97 = arith.mulf %96, %52 : vector<4x128xf32>
    %cst_28 = arith.constant 7.000000e+00 : f32
    %98 = vector.broadcast %cst_28 : f32 to vector<4x128xf32>
    %99 = arith.subf %98, %59 : vector<4x128xf32>
    %100 = arith.mulf %99, %53 : vector<4x128xf32>
    %101 = arith.addf %97, %100 : vector<4x128xf32>
    %cst_29 = arith.constant 6.000000e+00 : f32
    %102 = vector.broadcast %cst_29 : f32 to vector<4x128xf32>
    %103 = arith.subf %59, %102 : vector<4x128xf32>
    %104 = arith.mulf %103, %53 : vector<4x128xf32>
    %cst_30 = arith.constant 8.000000e+00 : f32
    %105 = vector.broadcast %cst_30 : f32 to vector<4x128xf32>
    %106 = arith.subf %105, %59 : vector<4x128xf32>
    %107 = arith.mulf %106, %54 : vector<4x128xf32>
    %108 = arith.addf %104, %107 : vector<4x128xf32>
    %cst_31 = arith.constant 7.000000e+00 : f32
    %109 = vector.broadcast %cst_31 : f32 to vector<4x128xf32>
    %110 = arith.subf %59, %109 : vector<4x128xf32>
    %111 = arith.mulf %110, %54 : vector<4x128xf32>
    %cst_32 = arith.constant 9.000000e+00 : f32
    %112 = vector.broadcast %cst_32 : f32 to vector<4x128xf32>
    %113 = arith.subf %112, %59 : vector<4x128xf32>
    %114 = arith.mulf %113, %55 : vector<4x128xf32>
    %115 = arith.addf %111, %114 : vector<4x128xf32>
    %cst_33 = arith.constant 4.500000e+00 : f32
    %116 = vector.broadcast %cst_33 : f32 to vector<4x128xf32>
    %117 = arith.mulf %57, %116 : vector<4x128xf32>
    %cst_34 = arith.constant 0.000000e+00 : f32
    %118 = vector.broadcast %cst_34 : f32 to vector<4x128xf32>
    %119 = arith.subf %117, %118 : vector<4x128xf32>
    %120 = arith.mulf %119, %66 : vector<4x128xf32>
    %cst_35 = arith.constant 1.500000e+00 : f32
    %121 = vector.broadcast %cst_35 : f32 to vector<4x128xf32>
    %122 = arith.subf %121, %117 : vector<4x128xf32>
    %123 = arith.mulf %122, %73 : vector<4x128xf32>
    %124 = arith.addf %120, %123 : vector<4x128xf32>
    %cst_36 = arith.constant 5.000000e-01 : f32
    %125 = vector.broadcast %cst_36 : f32 to vector<4x128xf32>
    %126 = arith.subf %117, %125 : vector<4x128xf32>
    %127 = arith.mulf %126, %73 : vector<4x128xf32>
    %cst_37 = arith.constant 2.000000e+00 : f32
    %128 = vector.broadcast %cst_37 : f32 to vector<4x128xf32>
    %129 = arith.subf %128, %117 : vector<4x128xf32>
    %130 = arith.mulf %129, %80 : vector<4x128xf32>
    %131 = arith.addf %127, %130 : vector<4x128xf32>
    %cst_38 = arith.constant 1.000000e+00 : f32
    %132 = vector.broadcast %cst_38 : f32 to vector<4x128xf32>
    %133 = arith.subf %117, %132 : vector<4x128xf32>
    %134 = arith.mulf %133, %80 : vector<4x128xf32>
    %cst_39 = arith.constant 2.500000e+00 : f32
    %135 = vector.broadcast %cst_39 : f32 to vector<4x128xf32>
    %136 = arith.subf %135, %117 : vector<4x128xf32>
    %137 = arith.mulf %136, %87 : vector<4x128xf32>
    %138 = arith.addf %134, %137 : vector<4x128xf32>
    %cst_40 = arith.constant 1.500000e+00 : f32
    %139 = vector.broadcast %cst_40 : f32 to vector<4x128xf32>
    %140 = arith.subf %117, %139 : vector<4x128xf32>
    %141 = arith.mulf %140, %87 : vector<4x128xf32>
    %cst_41 = arith.constant 3.000000e+00 : f32
    %142 = vector.broadcast %cst_41 : f32 to vector<4x128xf32>
    %143 = arith.subf %142, %117 : vector<4x128xf32>
    %144 = arith.mulf %143, %94 : vector<4x128xf32>
    %145 = arith.addf %141, %144 : vector<4x128xf32>
    %cst_42 = arith.constant 2.000000e+00 : f32
    %146 = vector.broadcast %cst_42 : f32 to vector<4x128xf32>
    %147 = arith.subf %117, %146 : vector<4x128xf32>
    %148 = arith.mulf %147, %94 : vector<4x128xf32>
    %cst_43 = arith.constant 3.500000e+00 : f32
    %149 = vector.broadcast %cst_43 : f32 to vector<4x128xf32>
    %150 = arith.subf %149, %117 : vector<4x128xf32>
    %151 = arith.mulf %150, %101 : vector<4x128xf32>
    %152 = arith.addf %148, %151 : vector<4x128xf32>
    %cst_44 = arith.constant 2.500000e+00 : f32
    %153 = vector.broadcast %cst_44 : f32 to vector<4x128xf32>
    %154 = arith.subf %117, %153 : vector<4x128xf32>
    %155 = arith.mulf %154, %101 : vector<4x128xf32>
    %cst_45 = arith.constant 4.000000e+00 : f32
    %156 = vector.broadcast %cst_45 : f32 to vector<4x128xf32>
    %157 = arith.subf %156, %117 : vector<4x128xf32>
    %158 = arith.mulf %157, %108 : vector<4x128xf32>
    %159 = arith.addf %155, %158 : vector<4x128xf32>
    %cst_46 = arith.constant 3.000000e+00 : f32
    %160 = vector.broadcast %cst_46 : f32 to vector<4x128xf32>
    %161 = arith.subf %117, %160 : vector<4x128xf32>
    %162 = arith.mulf %161, %108 : vector<4x128xf32>
    %cst_47 = arith.constant 4.500000e+00 : f32
    %163 = vector.broadcast %cst_47 : f32 to vector<4x128xf32>
    %164 = arith.subf %163, %117 : vector<4x128xf32>
    %165 = arith.mulf %164, %115 : vector<4x128xf32>
    %166 = arith.addf %162, %165 : vector<4x128xf32>
    %cst_48 = arith.constant 3.000000e+00 : f32
    %167 = vector.broadcast %cst_48 : f32 to vector<4x128xf32>
    %168 = arith.mulf %57, %167 : vector<4x128xf32>
    %cst_49 = arith.constant 0.000000e+00 : f32
    %169 = vector.broadcast %cst_49 : f32 to vector<4x128xf32>
    %170 = arith.subf %168, %169 : vector<4x128xf32>
    %171 = arith.mulf %170, %124 : vector<4x128xf32>
    %cst_50 = arith.constant 1.33333337 : f32
    %172 = vector.broadcast %cst_50 : f32 to vector<4x128xf32>
    %173 = arith.subf %172, %168 : vector<4x128xf32>
    %174 = arith.mulf %173, %131 : vector<4x128xf32>
    %175 = arith.addf %171, %174 : vector<4x128xf32>
    %cst_51 = arith.constant 0.333333343 : f32
    %176 = vector.broadcast %cst_51 : f32 to vector<4x128xf32>
    %177 = arith.subf %168, %176 : vector<4x128xf32>
    %178 = arith.mulf %177, %131 : vector<4x128xf32>
    %cst_52 = arith.constant 1.66666663 : f32
    %179 = vector.broadcast %cst_52 : f32 to vector<4x128xf32>
    %180 = arith.subf %179, %168 : vector<4x128xf32>
    %181 = arith.mulf %180, %138 : vector<4x128xf32>
    %182 = arith.addf %178, %181 : vector<4x128xf32>
    %cst_53 = arith.constant 0.666666686 : f32
    %183 = vector.broadcast %cst_53 : f32 to vector<4x128xf32>
    %184 = arith.subf %168, %183 : vector<4x128xf32>
    %185 = arith.mulf %184, %138 : vector<4x128xf32>
    %cst_54 = arith.constant 2.000000e+00 : f32
    %186 = vector.broadcast %cst_54 : f32 to vector<4x128xf32>
    %187 = arith.subf %186, %168 : vector<4x128xf32>
    %188 = arith.mulf %187, %145 : vector<4x128xf32>
    %189 = arith.addf %185, %188 : vector<4x128xf32>
    %cst_55 = arith.constant 1.000000e+00 : f32
    %190 = vector.broadcast %cst_55 : f32 to vector<4x128xf32>
    %191 = arith.subf %168, %190 : vector<4x128xf32>
    %192 = arith.mulf %191, %145 : vector<4x128xf32>
    %cst_56 = arith.constant 2.33333325 : f32
    %193 = vector.broadcast %cst_56 : f32 to vector<4x128xf32>
    %194 = arith.subf %193, %168 : vector<4x128xf32>
    %195 = arith.mulf %194, %152 : vector<4x128xf32>
    %196 = arith.addf %192, %195 : vector<4x128xf32>
    %cst_57 = arith.constant 1.33333337 : f32
    %197 = vector.broadcast %cst_57 : f32 to vector<4x128xf32>
    %198 = arith.subf %168, %197 : vector<4x128xf32>
    %199 = arith.mulf %198, %152 : vector<4x128xf32>
    %cst_58 = arith.constant 2.66666675 : f32
    %200 = vector.broadcast %cst_58 : f32 to vector<4x128xf32>
    %201 = arith.subf %200, %168 : vector<4x128xf32>
    %202 = arith.mulf %201, %159 : vector<4x128xf32>
    %203 = arith.addf %199, %202 : vector<4x128xf32>
    %cst_59 = arith.constant 1.66666663 : f32
    %204 = vector.broadcast %cst_59 : f32 to vector<4x128xf32>
    %205 = arith.subf %168, %204 : vector<4x128xf32>
    %206 = arith.mulf %205, %159 : vector<4x128xf32>
    %cst_60 = arith.constant 3.000000e+00 : f32
    %207 = vector.broadcast %cst_60 : f32 to vector<4x128xf32>
    %208 = arith.subf %207, %168 : vector<4x128xf32>
    %209 = arith.mulf %208, %166 : vector<4x128xf32>
    %210 = arith.addf %206, %209 : vector<4x128xf32>
    %c0_61 = arith.constant 0 : index
    %c0_62 = arith.constant 0 : index
    %211 = vector.load %arg6[%c0_61, %c0_62] : memref<48x128xf32, #tpu.memory_space<vmem>>, vector<4x128xf32>
    tpu.vector_store %arg6[%c0_61, %c0_62], %175 {strides = array<i32>} : memref<48x128xf32, #tpu.memory_space<vmem>>, vector<4x128xf32>,
    %c8 = arith.constant 8 : index
    %c0_63 = arith.constant 0 : index
    %212 = vector.load %arg6[%c8, %c0_63] : memref<48x128xf32, #tpu.memory_space<vmem>>, vector<4x128xf32>
    tpu.vector_store %arg6[%c8, %c0_63], %182 {strides = array<i32>} : memref<48x128xf32, #tpu.memory_space<vmem>>, vector<4x128xf32>,
    %c16 = arith.constant 16 : index
    %c0_64 = arith.constant 0 : index
    %213 = vector.load %arg6[%c16, %c0_64] : memref<48x128xf32, #tpu.memory_space<vmem>>, vector<4x128xf32>
    tpu.vector_store %arg6[%c16, %c0_64], %189 {strides = array<i32>} : memref<48x128xf32, #tpu.memory_space<vmem>>, vector<4x128xf32>,
    %c24 = arith.constant 24 : index
    %c0_65 = arith.constant 0 : index
    %214 = vector.load %arg6[%c24, %c0_65] : memref<48x128xf32, #tpu.memory_space<vmem>>, vector<4x128xf32>
    tpu.vector_store %arg6[%c24, %c0_65], %196 {strides = array<i32>} : memref<48x128xf32, #tpu.memory_space<vmem>>, vector<4x128xf32>,
    %c32 = arith.constant 32 : index
    %c0_66 = arith.constant 0 : index
    %215 = vector.load %arg6[%c32, %c0_66] : memref<48x128xf32, #tpu.memory_space<vmem>>, vector<4x128xf32>
    tpu.vector_store %arg6[%c32, %c0_66], %203 {strides = array<i32>} : memref<48x128xf32, #tpu.memory_space<vmem>>, vector<4x128xf32>,
    %c40 = arith.constant 40 : index
    %c0_67 = arith.constant 0 : index
    %216 = vector.load %arg6[%c40, %c0_67] : memref<48x128xf32, #tpu.memory_space<vmem>>, vector<4x128xf32>
    tpu.vector_store %arg6[%c40, %c0_67], %210 {strides = array<i32>} : memref<48x128xf32, #tpu.memory_space<vmem>>, vector<4x128xf32>,
    %c0_68 = arith.constant 0 : index
    %c0_69 = arith.constant 0 : index
    %217 = vector.load %arg6[%c0_68, %c0_69] : memref<48x128xf32, #tpu.memory_space<vmem>>, vector<48x128xf32>
    %c0_70 = arith.constant 0 : index
    %c0_71 = arith.constant 0 : index
    %218 = vector.load %arg2[%c0_70, %c0_71] : memref<8x48xf32, #tpu.memory_space<vmem>>, vector<8x48xf32>
    %cst_72 = arith.constant dense<0.000000e+00> : vector<8x128xf32>
    %219 = tpu.matmul %218, %217, %cst_72 {dimension_numbers = #tpu.dot_dimension_numbers<[1], [0], [0], [1], [0, 0, 1, 1], [], []>} : vector<8x48xf32>, vector<48x128xf32>, vector<8x128xf32> -> vector<8x128xf32>
    %cst_73 = arith.constant 0.000000e+00 : f32
    %220 = vector.broadcast %cst_73 : f32 to vector<8x128xf32>
    %221 = arith.subf %219, %220 : vector<8x128xf32>
    %cst_74 = arith.constant 1.000000e+00 : f32
    %222 = vector.broadcast %cst_74 : f32 to vector<8x128xf32>
    %223 = arith.mulf %221, %222 : vector<8x128xf32>
    %cst_75 = arith.constant 0.000000e+00 : f32
    %224 = vector.broadcast %cst_75 : f32 to vector<8x128xf32>
    %225 = arith.cmpf oge, %223, %224 : vector<8x128xf32>
    %226 = arith.extui %225 : vector<8x128xi1> to vector<8x128xi32>
    %227 = arith.sitofp %226 : vector<8x128xi32> to vector<8x128xf32>
    %cst_76 = arith.constant 0.111111112 : f32
    %228 = vector.broadcast %cst_76 : f32 to vector<8x128xf32>
    %229 = arith.cmpf oge, %223, %228 : vector<8x128xf32>
    %230 = arith.extui %229 : vector<8x128xi1> to vector<8x128xi32>
    %231 = arith.sitofp %230 : vector<8x128xi32> to vector<8x128xf32>
    %cst_77 = arith.constant 0.222222224 : f32
    %232 = vector.broadcast %cst_77 : f32 to vector<8x128xf32>
    %233 = arith.cmpf oge, %223, %232 : vector<8x128xf32>
    %234 = arith.extui %233 : vector<8x128xi1> to vector<8x128xi32>
    %235 = arith.sitofp %234 : vector<8x128xi32> to vector<8x128xf32>
    %cst_78 = arith.constant 0.333333343 : f32
    %236 = vector.broadcast %cst_78 : f32 to vector<8x128xf32>
    %237 = arith.cmpf oge, %223, %236 : vector<8x128xf32>
    %238 = arith.extui %237 : vector<8x128xi1> to vector<8x128xi32>
    %239 = arith.sitofp %238 : vector<8x128xi32> to vector<8x128xf32>
    %cst_79 = arith.constant 0.444444448 : f32
    %240 = vector.broadcast %cst_79 : f32 to vector<8x128xf32>
    %241 = arith.cmpf oge, %223, %240 : vector<8x128xf32>
    %242 = arith.extui %241 : vector<8x128xi1> to vector<8x128xi32>
    %243 = arith.sitofp %242 : vector<8x128xi32> to vector<8x128xf32>
    %cst_80 = arith.constant 0.555555582 : f32
    %244 = vector.broadcast %cst_80 : f32 to vector<8x128xf32>
    %245 = arith.cmpf oge, %223, %244 : vector<8x128xf32>
    %246 = arith.extui %245 : vector<8x128xi1> to vector<8x128xi32>
    %247 = arith.sitofp %246 : vector<8x128xi32> to vector<8x128xf32>
    %cst_81 = arith.constant 0.666666686 : f32
    %248 = vector.broadcast %cst_81 : f32 to vector<8x128xf32>
    %249 = arith.cmpf oge, %223, %248 : vector<8x128xf32>
    %250 = arith.extui %249 : vector<8x128xi1> to vector<8x128xi32>
    %251 = arith.sitofp %250 : vector<8x128xi32> to vector<8x128xf32>
    %cst_82 = arith.constant 0.777777791 : f32
    %252 = vector.broadcast %cst_82 : f32 to vector<8x128xf32>
    %253 = arith.cmpf oge, %223, %252 : vector<8x128xf32>
    %254 = arith.extui %253 : vector<8x128xi1> to vector<8x128xi32>
    %255 = arith.sitofp %254 : vector<8x128xi32> to vector<8x128xf32>
    %cst_83 = arith.constant 0.888888895 : f32
    %256 = vector.broadcast %cst_83 : f32 to vector<8x128xf32>
    %257 = arith.cmpf oge, %223, %256 : vector<8x128xf32>
    %258 = arith.extui %257 : vector<8x128xi1> to vector<8x128xi32>
    %259 = arith.sitofp %258 : vector<8x128xi32> to vector<8x128xf32>
    %cst_84 = arith.constant 1.000000e+00 : f32
    %260 = vector.broadcast %cst_84 : f32 to vector<8x128xf32>
    %261 = arith.cmpf oge, %223, %260 : vector<8x128xf32>
    %262 = arith.extui %261 : vector<8x128xi1> to vector<8x128xi32>
    %263 = arith.sitofp %262 : vector<8x128xi32> to vector<8x128xf32>
    %264 = arith.subf %227, %231 : vector<8x128xf32>
    %265 = arith.subf %231, %235 : vector<8x128xf32>
    %266 = arith.subf %235, %239 : vector<8x128xf32>
    %267 = arith.subf %239, %243 : vector<8x128xf32>
    %268 = arith.subf %243, %247 : vector<8x128xf32>
    %269 = arith.subf %247, %251 : vector<8x128xf32>
    %270 = arith.subf %251, %255 : vector<8x128xf32>
    %271 = arith.subf %255, %259 : vector<8x128xf32>
    %272 = arith.subf %259, %263 : vector<8x128xf32>
    %cst_85 = arith.constant 0.000000e+00 : f32
    %273 = vector.broadcast %cst_85 : f32 to vector<8x128xf32>
    %274 = arith.subf %223, %273 : vector<8x128xf32>
    %cst_86 = arith.constant 9.000000e+00 : f32
    %275 = vector.broadcast %cst_86 : f32 to vector<8x128xf32>
    %276 = arith.mulf %274, %275 : vector<8x128xf32>
    %cst_87 = arith.constant 0.000000e+00 : f32
    %277 = vector.broadcast %cst_87 : f32 to vector<8x128xf32>
    %278 = arith.subf %276, %277 : vector<8x128xf32>
    %279 = arith.mulf %278, %264 : vector<8x128xf32>
    %cst_88 = arith.constant 2.000000e+00 : f32
    %280 = vector.broadcast %cst_88 : f32 to vector<8x128xf32>
    %281 = arith.subf %280, %276 : vector<8x128xf32>
    %282 = arith.mulf %281, %265 : vector<8x128xf32>
    %283 = arith.addf %279, %282 : vector<8x128xf32>
    %cst_89 = arith.constant 1.000000e+00 : f32
    %284 = vector.broadcast %cst_89 : f32 to vector<8x128xf32>
    %285 = arith.subf %276, %284 : vector<8x128xf32>
    %286 = arith.mulf %285, %265 : vector<8x128xf32>
    %cst_90 = arith.constant 3.000000e+00 : f32
    %287 = vector.broadcast %cst_90 : f32 to vector<8x128xf32>
    %288 = arith.subf %287, %276 : vector<8x128xf32>
    %289 = arith.mulf %288, %266 : vector<8x128xf32>
    %290 = arith.addf %286, %289 : vector<8x128xf32>
    %cst_91 = arith.constant 2.000000e+00 : f32
    %291 = vector.broadcast %cst_91 : f32 to vector<8x128xf32>
    %292 = arith.subf %276, %291 : vector<8x128xf32>
    %293 = arith.mulf %292, %266 : vector<8x128xf32>
    %cst_92 = arith.constant 4.000000e+00 : f32
    %294 = vector.broadcast %cst_92 : f32 to vector<8x128xf32>
    %295 = arith.subf %294, %276 : vector<8x128xf32>
    %296 = arith.mulf %295, %267 : vector<8x128xf32>
    %297 = arith.addf %293, %296 : vector<8x128xf32>
    %cst_93 = arith.constant 3.000000e+00 : f32
    %298 = vector.broadcast %cst_93 : f32 to vector<8x128xf32>
    %299 = arith.subf %276, %298 : vector<8x128xf32>
    %300 = arith.mulf %299, %267 : vector<8x128xf32>
    %cst_94 = arith.constant 5.000000e+00 : f32
    %301 = vector.broadcast %cst_94 : f32 to vector<8x128xf32>
    %302 = arith.subf %301, %276 : vector<8x128xf32>
    %303 = arith.mulf %302, %268 : vector<8x128xf32>
    %304 = arith.addf %300, %303 : vector<8x128xf32>
    %cst_95 = arith.constant 4.000000e+00 : f32
    %305 = vector.broadcast %cst_95 : f32 to vector<8x128xf32>
    %306 = arith.subf %276, %305 : vector<8x128xf32>
    %307 = arith.mulf %306, %268 : vector<8x128xf32>
    %cst_96 = arith.constant 6.000000e+00 : f32
    %308 = vector.broadcast %cst_96 : f32 to vector<8x128xf32>
    %309 = arith.subf %308, %276 : vector<8x128xf32>
    %310 = arith.mulf %309, %269 : vector<8x128xf32>
    %311 = arith.addf %307, %310 : vector<8x128xf32>
    %cst_97 = arith.constant 5.000000e+00 : f32
    %312 = vector.broadcast %cst_97 : f32 to vector<8x128xf32>
    %313 = arith.subf %276, %312 : vector<8x128xf32>
    %314 = arith.mulf %313, %269 : vector<8x128xf32>
    %cst_98 = arith.constant 7.000000e+00 : f32
    %315 = vector.broadcast %cst_98 : f32 to vector<8x128xf32>
    %316 = arith.subf %315, %276 : vector<8x128xf32>
    %317 = arith.mulf %316, %270 : vector<8x128xf32>
    %318 = arith.addf %314, %317 : vector<8x128xf32>
    %cst_99 = arith.constant 6.000000e+00 : f32
    %319 = vector.broadcast %cst_99 : f32 to vector<8x128xf32>
    %320 = arith.subf %276, %319 : vector<8x128xf32>
    %321 = arith.mulf %320, %270 : vector<8x128xf32>
    %cst_100 = arith.constant 8.000000e+00 : f32
    %322 = vector.broadcast %cst_100 : f32 to vector<8x128xf32>
    %323 = arith.subf %322, %276 : vector<8x128xf32>
    %324 = arith.mulf %323, %271 : vector<8x128xf32>
    %325 = arith.addf %321, %324 : vector<8x128xf32>
    %cst_101 = arith.constant 7.000000e+00 : f32
    %326 = vector.broadcast %cst_101 : f32 to vector<8x128xf32>
    %327 = arith.subf %276, %326 : vector<8x128xf32>
    %328 = arith.mulf %327, %271 : vector<8x128xf32>
    %cst_102 = arith.constant 9.000000e+00 : f32
    %329 = vector.broadcast %cst_102 : f32 to vector<8x128xf32>
    %330 = arith.subf %329, %276 : vector<8x128xf32>
    %331 = arith.mulf %330, %272 : vector<8x128xf32>
    %332 = arith.addf %328, %331 : vector<8x128xf32>
    %cst_103 = arith.constant 4.500000e+00 : f32
    %333 = vector.broadcast %cst_103 : f32 to vector<8x128xf32>
    %334 = arith.mulf %274, %333 : vector<8x128xf32>
    %cst_104 = arith.constant 0.000000e+00 : f32
    %335 = vector.broadcast %cst_104 : f32 to vector<8x128xf32>
    %336 = arith.subf %334, %335 : vector<8x128xf32>
    %337 = arith.mulf %336, %283 : vector<8x128xf32>
    %cst_105 = arith.constant 1.500000e+00 : f32
    %338 = vector.broadcast %cst_105 : f32 to vector<8x128xf32>
    %339 = arith.subf %338, %334 : vector<8x128xf32>
    %340 = arith.mulf %339, %290 : vector<8x128xf32>
    %341 = arith.addf %337, %340 : vector<8x128xf32>
    %cst_106 = arith.constant 5.000000e-01 : f32
    %342 = vector.broadcast %cst_106 : f32 to vector<8x128xf32>
    %343 = arith.subf %334, %342 : vector<8x128xf32>
    %344 = arith.mulf %343, %290 : vector<8x128xf32>
    %cst_107 = arith.constant 2.000000e+00 : f32
    %345 = vector.broadcast %cst_107 : f32 to vector<8x128xf32>
    %346 = arith.subf %345, %334 : vector<8x128xf32>
    %347 = arith.mulf %346, %297 : vector<8x128xf32>
    %348 = arith.addf %344, %347 : vector<8x128xf32>
    %cst_108 = arith.constant 1.000000e+00 : f32
    %349 = vector.broadcast %cst_108 : f32 to vector<8x128xf32>
    %350 = arith.subf %334, %349 : vector<8x128xf32>
    %351 = arith.mulf %350, %297 : vector<8x128xf32>
    %cst_109 = arith.constant 2.500000e+00 : f32
    %352 = vector.broadcast %cst_109 : f32 to vector<8x128xf32>
    %353 = arith.subf %352, %334 : vector<8x128xf32>
    %354 = arith.mulf %353, %304 : vector<8x128xf32>
    %355 = arith.addf %351, %354 : vector<8x128xf32>
    %cst_110 = arith.constant 1.500000e+00 : f32
    %356 = vector.broadcast %cst_110 : f32 to vector<8x128xf32>
    %357 = arith.subf %334, %356 : vector<8x128xf32>
    %358 = arith.mulf %357, %304 : vector<8x128xf32>
    %cst_111 = arith.constant 3.000000e+00 : f32
    %359 = vector.broadcast %cst_111 : f32 to vector<8x128xf32>
    %360 = arith.subf %359, %334 : vector<8x128xf32>
    %361 = arith.mulf %360, %311 : vector<8x128xf32>
    %362 = arith.addf %358, %361 : vector<8x128xf32>
    %cst_112 = arith.constant 2.000000e+00 : f32
    %363 = vector.broadcast %cst_112 : f32 to vector<8x128xf32>
    %364 = arith.subf %334, %363 : vector<8x128xf32>
    %365 = arith.mulf %364, %311 : vector<8x128xf32>
    %cst_113 = arith.constant 3.500000e+00 : f32
    %366 = vector.broadcast %cst_113 : f32 to vector<8x128xf32>
    %367 = arith.subf %366, %334 : vector<8x128xf32>
    %368 = arith.mulf %367, %318 : vector<8x128xf32>
    %369 = arith.addf %365, %368 : vector<8x128xf32>
    %cst_114 = arith.constant 2.500000e+00 : f32
    %370 = vector.broadcast %cst_114 : f32 to vector<8x128xf32>
    %371 = arith.subf %334, %370 : vector<8x128xf32>
    %372 = arith.mulf %371, %318 : vector<8x128xf32>
    %cst_115 = arith.constant 4.000000e+00 : f32
    %373 = vector.broadcast %cst_115 : f32 to vector<8x128xf32>
    %374 = arith.subf %373, %334 : vector<8x128xf32>
    %375 = arith.mulf %374, %325 : vector<8x128xf32>
    %376 = arith.addf %372, %375 : vector<8x128xf32>
    %cst_116 = arith.constant 3.000000e+00 : f32
    %377 = vector.broadcast %cst_116 : f32 to vector<8x128xf32>
    %378 = arith.subf %334, %377 : vector<8x128xf32>
    %379 = arith.mulf %378, %325 : vector<8x128xf32>
    %cst_117 = arith.constant 4.500000e+00 : f32
    %380 = vector.broadcast %cst_117 : f32 to vector<8x128xf32>
    %381 = arith.subf %380, %334 : vector<8x128xf32>
    %382 = arith.mulf %381, %332 : vector<8x128xf32>
    %383 = arith.addf %379, %382 : vector<8x128xf32>
    %cst_118 = arith.constant 3.000000e+00 : f32
    %384 = vector.broadcast %cst_118 : f32 to vector<8x128xf32>
    %385 = arith.mulf %274, %384 : vector<8x128xf32>
    %cst_119 = arith.constant 0.000000e+00 : f32
    %386 = vector.broadcast %cst_119 : f32 to vector<8x128xf32>
    %387 = arith.subf %385, %386 : vector<8x128xf32>
    %388 = arith.mulf %387, %341 : vector<8x128xf32>
    %cst_120 = arith.constant 1.33333337 : f32
    %389 = vector.broadcast %cst_120 : f32 to vector<8x128xf32>
    %390 = arith.subf %389, %385 : vector<8x128xf32>
    %391 = arith.mulf %390, %348 : vector<8x128xf32>
    %392 = arith.addf %388, %391 : vector<8x128xf32>
    %cst_121 = arith.constant 0.333333343 : f32
    %393 = vector.broadcast %cst_121 : f32 to vector<8x128xf32>
    %394 = arith.subf %385, %393 : vector<8x128xf32>
    %395 = arith.mulf %394, %348 : vector<8x128xf32>
    %cst_122 = arith.constant 1.66666663 : f32
    %396 = vector.broadcast %cst_122 : f32 to vector<8x128xf32>
    %397 = arith.subf %396, %385 : vector<8x128xf32>
    %398 = arith.mulf %397, %355 : vector<8x128xf32>
    %399 = arith.addf %395, %398 : vector<8x128xf32>
    %cst_123 = arith.constant 0.666666686 : f32
    %400 = vector.broadcast %cst_123 : f32 to vector<8x128xf32>
    %401 = arith.subf %385, %400 : vector<8x128xf32>
    %402 = arith.mulf %401, %355 : vector<8x128xf32>
    %cst_124 = arith.constant 2.000000e+00 : f32
    %403 = vector.broadcast %cst_124 : f32 to vector<8x128xf32>
    %404 = arith.subf %403, %385 : vector<8x128xf32>
    %405 = arith.mulf %404, %362 : vector<8x128xf32>
    %406 = arith.addf %402, %405 : vector<8x128xf32>
    %cst_125 = arith.constant 1.000000e+00 : f32
    %407 = vector.broadcast %cst_125 : f32 to vector<8x128xf32>
    %408 = arith.subf %385, %407 : vector<8x128xf32>
    %409 = arith.mulf %408, %362 : vector<8x128xf32>
    %cst_126 = arith.constant 2.33333325 : f32
    %410 = vector.broadcast %cst_126 : f32 to vector<8x128xf32>
    %411 = arith.subf %410, %385 : vector<8x128xf32>
    %412 = arith.mulf %411, %369 : vector<8x128xf32>
    %413 = arith.addf %409, %412 : vector<8x128xf32>
    %cst_127 = arith.constant 1.33333337 : f32
    %414 = vector.broadcast %cst_127 : f32 to vector<8x128xf32>
    %415 = arith.subf %385, %414 : vector<8x128xf32>
    %416 = arith.mulf %415, %369 : vector<8x128xf32>
    %cst_128 = arith.constant 2.66666675 : f32
    %417 = vector.broadcast %cst_128 : f32 to vector<8x128xf32>
    %418 = arith.subf %417, %385 : vector<8x128xf32>
    %419 = arith.mulf %418, %376 : vector<8x128xf32>
    %420 = arith.addf %416, %419 : vector<8x128xf32>
    %cst_129 = arith.constant 1.66666663 : f32
    %421 = vector.broadcast %cst_129 : f32 to vector<8x128xf32>
    %422 = arith.subf %385, %421 : vector<8x128xf32>
    %423 = arith.mulf %422, %376 : vector<8x128xf32>
    %cst_130 = arith.constant 3.000000e+00 : f32
    %424 = vector.broadcast %cst_130 : f32 to vector<8x128xf32>
    %425 = arith.subf %424, %385 : vector<8x128xf32>
    %426 = arith.mulf %425, %383 : vector<8x128xf32>
    %427 = arith.addf %423, %426 : vector<8x128xf32>
    %c0_131 = arith.constant 0 : index
    %c0_132 = arith.constant 0 : index
    %428 = vector.load %arg6[%c0_131, %c0_132] : memref<48x128xf32, #tpu.memory_space<vmem>>, vector<8x128xf32>
    tpu.vector_store %arg6[%c0_131, %c0_132], %392 {strides = array<i32>} : memref<48x128xf32, #tpu.memory_space<vmem>>, vector<8x128xf32>,
    %c8_133 = arith.constant 8 : index
    %c0_134 = arith.constant 0 : index
    %429 = vector.load %arg6[%c8_133, %c0_134] : memref<48x128xf32, #tpu.memory_space<vmem>>, vector<8x128xf32>
    tpu.vector_store %arg6[%c8_133, %c0_134], %399 {strides = array<i32>} : memref<48x128xf32, #tpu.memory_space<vmem>>, vector<8x128xf32>,
    %c16_135 = arith.constant 16 : index
    %c0_136 = arith.constant 0 : index
    %430 = vector.load %arg6[%c16_135, %c0_136] : memref<48x128xf32, #tpu.memory_space<vmem>>, vector<8x128xf32>
    tpu.vector_store %arg6[%c16_135, %c0_136], %406 {strides = array<i32>} : memref<48x128xf32, #tpu.memory_space<vmem>>, vector<8x128xf32>,
    %c24_137 = arith.constant 24 : index
    %c0_138 = arith.constant 0 : index
    %431 = vector.load %arg6[%c24_137, %c0_138] : memref<48x128xf32, #tpu.memory_space<vmem>>, vector<8x128xf32>
    tpu.vector_store %arg6[%c24_137, %c0_138], %413 {strides = array<i32>} : memref<48x128xf32, #tpu.memory_space<vmem>>, vector<8x128xf32>,
    %c32_139 = arith.constant 32 : index
    %c0_140 = arith.constant 0 : index
    %432 = vector.load %arg6[%c32_139, %c0_140] : memref<48x128xf32, #tpu.memory_space<vmem>>, vector<8x128xf32>
    tpu.vector_store %arg6[%c32_139, %c0_140], %420 {strides = array<i32>} : memref<48x128xf32, #tpu.memory_space<vmem>>, vector<8x128xf32>,
    %c40_141 = arith.constant 40 : index
    %c0_142 = arith.constant 0 : index
    %433 = vector.load %arg6[%c40_141, %c0_142] : memref<48x128xf32, #tpu.memory_space<vmem>>, vector<8x128xf32>
    tpu.vector_store %arg6[%c40_141, %c0_142], %427 {strides = array<i32>} : memref<48x128xf32, #tpu.memory_space<vmem>>, vector<8x128xf32>,
    %c0_143 = arith.constant 0 : index
    %c0_144 = arith.constant 0 : index
    %434 = vector.load %arg6[%c0_143, %c0_144] : memref<48x128xf32, #tpu.memory_space<vmem>>, vector<48x128xf32>
    %c0_145 = arith.constant 0 : index
    %c0_146 = arith.constant 0 : index
    %435 = vector.load %arg3[%c0_145, %c0_146] : memref<6x48xf32, #tpu.memory_space<vmem>>, vector<6x48xf32>
    %cst_147 = arith.constant dense<0.000000e+00> : vector<6x128xf32>
    %436 = tpu.matmul %435, %434, %cst_147 {dimension_numbers = #tpu.dot_dimension_numbers<[1], [0], [0], [1], [0, 0, 1, 1], [], []>} : vector<6x48xf32>, vector<48x128xf32>, vector<6x128xf32> -> vector<6x128xf32>
    %cst_148 = arith.constant 0.000000e+00 : f32
    %437 = vector.broadcast %cst_148 : f32 to vector<6x128xf32>
    %438 = arith.subf %436, %437 : vector<6x128xf32>
    %cst_149 = arith.constant 1.000000e+00 : f32
    %439 = vector.broadcast %cst_149 : f32 to vector<6x128xf32>
    %440 = arith.mulf %438, %439 : vector<6x128xf32>
    %cst_150 = arith.constant 0.000000e+00 : f32
    %441 = vector.broadcast %cst_150 : f32 to vector<6x128xf32>
    %442 = arith.cmpf oge, %440, %441 : vector<6x128xf32>
    %443 = arith.extui %442 : vector<6x128xi1> to vector<6x128xi32>
    %444 = arith.sitofp %443 : vector<6x128xi32> to vector<6x128xf32>
    %cst_151 = arith.constant 0.111111112 : f32
    %445 = vector.broadcast %cst_151 : f32 to vector<6x128xf32>
    %446 = arith.cmpf oge, %440, %445 : vector<6x128xf32>
    %447 = arith.extui %446 : vector<6x128xi1> to vector<6x128xi32>
    %448 = arith.sitofp %447 : vector<6x128xi32> to vector<6x128xf32>
    %cst_152 = arith.constant 0.222222224 : f32
    %449 = vector.broadcast %cst_152 : f32 to vector<6x128xf32>
    %450 = arith.cmpf oge, %440, %449 : vector<6x128xf32>
    %451 = arith.extui %450 : vector<6x128xi1> to vector<6x128xi32>
    %452 = arith.sitofp %451 : vector<6x128xi32> to vector<6x128xf32>
    %cst_153 = arith.constant 0.333333343 : f32
    %453 = vector.broadcast %cst_153 : f32 to vector<6x128xf32>
    %454 = arith.cmpf oge, %440, %453 : vector<6x128xf32>
    %455 = arith.extui %454 : vector<6x128xi1> to vector<6x128xi32>
    %456 = arith.sitofp %455 : vector<6x128xi32> to vector<6x128xf32>
    %cst_154 = arith.constant 0.444444448 : f32
    %457 = vector.broadcast %cst_154 : f32 to vector<6x128xf32>
    %458 = arith.cmpf oge, %440, %457 : vector<6x128xf32>
    %459 = arith.extui %458 : vector<6x128xi1> to vector<6x128xi32>
    %460 = arith.sitofp %459 : vector<6x128xi32> to vector<6x128xf32>
    %cst_155 = arith.constant 0.555555582 : f32
    %461 = vector.broadcast %cst_155 : f32 to vector<6x128xf32>
    %462 = arith.cmpf oge, %440, %461 : vector<6x128xf32>
    %463 = arith.extui %462 : vector<6x128xi1> to vector<6x128xi32>
    %464 = arith.sitofp %463 : vector<6x128xi32> to vector<6x128xf32>
    %cst_156 = arith.constant 0.666666686 : f32
    %465 = vector.broadcast %cst_156 : f32 to vector<6x128xf32>
    %466 = arith.cmpf oge, %440, %465 : vector<6x128xf32>
    %467 = arith.extui %466 : vector<6x128xi1> to vector<6x128xi32>
    %468 = arith.sitofp %467 : vector<6x128xi32> to vector<6x128xf32>
    %cst_157 = arith.constant 0.777777791 : f32
    %469 = vector.broadcast %cst_157 : f32 to vector<6x128xf32>
    %470 = arith.cmpf oge, %440, %469 : vector<6x128xf32>
    %471 = arith.extui %470 : vector<6x128xi1> to vector<6x128xi32>
    %472 = arith.sitofp %471 : vector<6x128xi32> to vector<6x128xf32>
    %cst_158 = arith.constant 0.888888895 : f32
    %473 = vector.broadcast %cst_158 : f32 to vector<6x128xf32>
    %474 = arith.cmpf oge, %440, %473 : vector<6x128xf32>
    %475 = arith.extui %474 : vector<6x128xi1> to vector<6x128xi32>
    %476 = arith.sitofp %475 : vector<6x128xi32> to vector<6x128xf32>
    %cst_159 = arith.constant 1.000000e+00 : f32
    %477 = vector.broadcast %cst_159 : f32 to vector<6x128xf32>
    %478 = arith.cmpf oge, %440, %477 : vector<6x128xf32>
    %479 = arith.extui %478 : vector<6x128xi1> to vector<6x128xi32>
    %480 = arith.sitofp %479 : vector<6x128xi32> to vector<6x128xf32>
    %481 = arith.subf %444, %448 : vector<6x128xf32>
    %482 = arith.subf %448, %452 : vector<6x128xf32>
    %483 = arith.subf %452, %456 : vector<6x128xf32>
    %484 = arith.subf %456, %460 : vector<6x128xf32>
    %485 = arith.subf %460, %464 : vector<6x128xf32>
    %486 = arith.subf %464, %468 : vector<6x128xf32>
    %487 = arith.subf %468, %472 : vector<6x128xf32>
    %488 = arith.subf %472, %476 : vector<6x128xf32>
    %489 = arith.subf %476, %480 : vector<6x128xf32>
    %cst_160 = arith.constant 0.000000e+00 : f32
    %490 = vector.broadcast %cst_160 : f32 to vector<6x128xf32>
    %491 = arith.subf %440, %490 : vector<6x128xf32>
    %cst_161 = arith.constant 9.000000e+00 : f32
    %492 = vector.broadcast %cst_161 : f32 to vector<6x128xf32>
    %493 = arith.mulf %491, %492 : vector<6x128xf32>
    %cst_162 = arith.constant 0.000000e+00 : f32
    %494 = vector.broadcast %cst_162 : f32 to vector<6x128xf32>
    %495 = arith.subf %493, %494 : vector<6x128xf32>
    %496 = arith.mulf %495, %481 : vector<6x128xf32>
    %cst_163 = arith.constant 2.000000e+00 : f32
    %497 = vector.broadcast %cst_163 : f32 to vector<6x128xf32>
    %498 = arith.subf %497, %493 : vector<6x128xf32>
    %499 = arith.mulf %498, %482 : vector<6x128xf32>
    %500 = arith.addf %496, %499 : vector<6x128xf32>
    %cst_164 = arith.constant 1.000000e+00 : f32
    %501 = vector.broadcast %cst_164 : f32 to vector<6x128xf32>
    %502 = arith.subf %493, %501 : vector<6x128xf32>
    %503 = arith.mulf %502, %482 : vector<6x128xf32>
    %cst_165 = arith.constant 3.000000e+00 : f32
    %504 = vector.broadcast %cst_165 : f32 to vector<6x128xf32>
    %505 = arith.subf %504, %493 : vector<6x128xf32>
    %506 = arith.mulf %505, %483 : vector<6x128xf32>
    %507 = arith.addf %503, %506 : vector<6x128xf32>
    %cst_166 = arith.constant 2.000000e+00 : f32
    %508 = vector.broadcast %cst_166 : f32 to vector<6x128xf32>
    %509 = arith.subf %493, %508 : vector<6x128xf32>
    %510 = arith.mulf %509, %483 : vector<6x128xf32>
    %cst_167 = arith.constant 4.000000e+00 : f32
    %511 = vector.broadcast %cst_167 : f32 to vector<6x128xf32>
    %512 = arith.subf %511, %493 : vector<6x128xf32>
    %513 = arith.mulf %512, %484 : vector<6x128xf32>
    %514 = arith.addf %510, %513 : vector<6x128xf32>
    %cst_168 = arith.constant 3.000000e+00 : f32
    %515 = vector.broadcast %cst_168 : f32 to vector<6x128xf32>
    %516 = arith.subf %493, %515 : vector<6x128xf32>
    %517 = arith.mulf %516, %484 : vector<6x128xf32>
    %cst_169 = arith.constant 5.000000e+00 : f32
    %518 = vector.broadcast %cst_169 : f32 to vector<6x128xf32>
    %519 = arith.subf %518, %493 : vector<6x128xf32>
    %520 = arith.mulf %519, %485 : vector<6x128xf32>
    %521 = arith.addf %517, %520 : vector<6x128xf32>
    %cst_170 = arith.constant 4.000000e+00 : f32
    %522 = vector.broadcast %cst_170 : f32 to vector<6x128xf32>
    %523 = arith.subf %493, %522 : vector<6x128xf32>
    %524 = arith.mulf %523, %485 : vector<6x128xf32>
    %cst_171 = arith.constant 6.000000e+00 : f32
    %525 = vector.broadcast %cst_171 : f32 to vector<6x128xf32>
    %526 = arith.subf %525, %493 : vector<6x128xf32>
    %527 = arith.mulf %526, %486 : vector<6x128xf32>
    %528 = arith.addf %524, %527 : vector<6x128xf32>
    %cst_172 = arith.constant 5.000000e+00 : f32
    %529 = vector.broadcast %cst_172 : f32 to vector<6x128xf32>
    %530 = arith.subf %493, %529 : vector<6x128xf32>
    %531 = arith.mulf %530, %486 : vector<6x128xf32>
    %cst_173 = arith.constant 7.000000e+00 : f32
    %532 = vector.broadcast %cst_173 : f32 to vector<6x128xf32>
    %533 = arith.subf %532, %493 : vector<6x128xf32>
    %534 = arith.mulf %533, %487 : vector<6x128xf32>
    %535 = arith.addf %531, %534 : vector<6x128xf32>
    %cst_174 = arith.constant 6.000000e+00 : f32
    %536 = vector.broadcast %cst_174 : f32 to vector<6x128xf32>
    %537 = arith.subf %493, %536 : vector<6x128xf32>
    %538 = arith.mulf %537, %487 : vector<6x128xf32>
    %cst_175 = arith.constant 8.000000e+00 : f32
    %539 = vector.broadcast %cst_175 : f32 to vector<6x128xf32>
    %540 = arith.subf %539, %493 : vector<6x128xf32>
    %541 = arith.mulf %540, %488 : vector<6x128xf32>
    %542 = arith.addf %538, %541 : vector<6x128xf32>
    %cst_176 = arith.constant 7.000000e+00 : f32
    %543 = vector.broadcast %cst_176 : f32 to vector<6x128xf32>
    %544 = arith.subf %493, %543 : vector<6x128xf32>
    %545 = arith.mulf %544, %488 : vector<6x128xf32>
    %cst_177 = arith.constant 9.000000e+00 : f32
    %546 = vector.broadcast %cst_177 : f32 to vector<6x128xf32>
    %547 = arith.subf %546, %493 : vector<6x128xf32>
    %548 = arith.mulf %547, %489 : vector<6x128xf32>
    %549 = arith.addf %545, %548 : vector<6x128xf32>
    %cst_178 = arith.constant 4.500000e+00 : f32
    %550 = vector.broadcast %cst_178 : f32 to vector<6x128xf32>
    %551 = arith.mulf %491, %550 : vector<6x128xf32>
    %cst_179 = arith.constant 0.000000e+00 : f32
    %552 = vector.broadcast %cst_179 : f32 to vector<6x128xf32>
    %553 = arith.subf %551, %552 : vector<6x128xf32>
    %554 = arith.mulf %553, %500 : vector<6x128xf32>
    %cst_180 = arith.constant 1.500000e+00 : f32
    %555 = vector.broadcast %cst_180 : f32 to vector<6x128xf32>
    %556 = arith.subf %555, %551 : vector<6x128xf32>
    %557 = arith.mulf %556, %507 : vector<6x128xf32>
    %558 = arith.addf %554, %557 : vector<6x128xf32>
    %cst_181 = arith.constant 5.000000e-01 : f32
    %559 = vector.broadcast %cst_181 : f32 to vector<6x128xf32>
    %560 = arith.subf %551, %559 : vector<6x128xf32>
    %561 = arith.mulf %560, %507 : vector<6x128xf32>
    %cst_182 = arith.constant 2.000000e+00 : f32
    %562 = vector.broadcast %cst_182 : f32 to vector<6x128xf32>
    %563 = arith.subf %562, %551 : vector<6x128xf32>
    %564 = arith.mulf %563, %514 : vector<6x128xf32>
    %565 = arith.addf %561, %564 : vector<6x128xf32>
    %cst_183 = arith.constant 1.000000e+00 : f32
    %566 = vector.broadcast %cst_183 : f32 to vector<6x128xf32>
    %567 = arith.subf %551, %566 : vector<6x128xf32>
    %568 = arith.mulf %567, %514 : vector<6x128xf32>
    %cst_184 = arith.constant 2.500000e+00 : f32
    %569 = vector.broadcast %cst_184 : f32 to vector<6x128xf32>
    %570 = arith.subf %569, %551 : vector<6x128xf32>
    %571 = arith.mulf %570, %521 : vector<6x128xf32>
    %572 = arith.addf %568, %571 : vector<6x128xf32>
    %cst_185 = arith.constant 1.500000e+00 : f32
    %573 = vector.broadcast %cst_185 : f32 to vector<6x128xf32>
    %574 = arith.subf %551, %573 : vector<6x128xf32>
    %575 = arith.mulf %574, %521 : vector<6x128xf32>
    %cst_186 = arith.constant 3.000000e+00 : f32
    %576 = vector.broadcast %cst_186 : f32 to vector<6x128xf32>
    %577 = arith.subf %576, %551 : vector<6x128xf32>
    %578 = arith.mulf %577, %528 : vector<6x128xf32>
    %579 = arith.addf %575, %578 : vector<6x128xf32>
    %cst_187 = arith.constant 2.000000e+00 : f32
    %580 = vector.broadcast %cst_187 : f32 to vector<6x128xf32>
    %581 = arith.subf %551, %580 : vector<6x128xf32>
    %582 = arith.mulf %581, %528 : vector<6x128xf32>
    %cst_188 = arith.constant 3.500000e+00 : f32
    %583 = vector.broadcast %cst_188 : f32 to vector<6x128xf32>
    %584 = arith.subf %583, %551 : vector<6x128xf32>
    %585 = arith.mulf %584, %535 : vector<6x128xf32>
    %586 = arith.addf %582, %585 : vector<6x128xf32>
    %cst_189 = arith.constant 2.500000e+00 : f32
    %587 = vector.broadcast %cst_189 : f32 to vector<6x128xf32>
    %588 = arith.subf %551, %587 : vector<6x128xf32>
    %589 = arith.mulf %588, %535 : vector<6x128xf32>
    %cst_190 = arith.constant 4.000000e+00 : f32
    %590 = vector.broadcast %cst_190 : f32 to vector<6x128xf32>
    %591 = arith.subf %590, %551 : vector<6x128xf32>
    %592 = arith.mulf %591, %542 : vector<6x128xf32>
    %593 = arith.addf %589, %592 : vector<6x128xf32>
    %cst_191 = arith.constant 3.000000e+00 : f32
    %594 = vector.broadcast %cst_191 : f32 to vector<6x128xf32>
    %595 = arith.subf %551, %594 : vector<6x128xf32>
    %596 = arith.mulf %595, %542 : vector<6x128xf32>
    %cst_192 = arith.constant 4.500000e+00 : f32
    %597 = vector.broadcast %cst_192 : f32 to vector<6x128xf32>
    %598 = arith.subf %597, %551 : vector<6x128xf32>
    %599 = arith.mulf %598, %549 : vector<6x128xf32>
    %600 = arith.addf %596, %599 : vector<6x128xf32>
    %cst_193 = arith.constant 3.000000e+00 : f32
    %601 = vector.broadcast %cst_193 : f32 to vector<6x128xf32>
    %602 = arith.mulf %491, %601 : vector<6x128xf32>
    %cst_194 = arith.constant 0.000000e+00 : f32
    %603 = vector.broadcast %cst_194 : f32 to vector<6x128xf32>
    %604 = arith.subf %602, %603 : vector<6x128xf32>
    %605 = arith.mulf %604, %558 : vector<6x128xf32>
    %cst_195 = arith.constant 1.33333337 : f32
    %606 = vector.broadcast %cst_195 : f32 to vector<6x128xf32>
    %607 = arith.subf %606, %602 : vector<6x128xf32>
    %608 = arith.mulf %607, %565 : vector<6x128xf32>
    %609 = arith.addf %605, %608 : vector<6x128xf32>
    %cst_196 = arith.constant 0.333333343 : f32
    %610 = vector.broadcast %cst_196 : f32 to vector<6x128xf32>
    %611 = arith.subf %602, %610 : vector<6x128xf32>
    %612 = arith.mulf %611, %565 : vector<6x128xf32>
    %cst_197 = arith.constant 1.66666663 : f32
    %613 = vector.broadcast %cst_197 : f32 to vector<6x128xf32>
    %614 = arith.subf %613, %602 : vector<6x128xf32>
    %615 = arith.mulf %614, %572 : vector<6x128xf32>
    %616 = arith.addf %612, %615 : vector<6x128xf32>
    %cst_198 = arith.constant 0.666666686 : f32
    %617 = vector.broadcast %cst_198 : f32 to vector<6x128xf32>
    %618 = arith.subf %602, %617 : vector<6x128xf32>
    %619 = arith.mulf %618, %572 : vector<6x128xf32>
    %cst_199 = arith.constant 2.000000e+00 : f32
    %620 = vector.broadcast %cst_199 : f32 to vector<6x128xf32>
    %621 = arith.subf %620, %602 : vector<6x128xf32>
    %622 = arith.mulf %621, %579 : vector<6x128xf32>
    %623 = arith.addf %619, %622 : vector<6x128xf32>
    %cst_200 = arith.constant 1.000000e+00 : f32
    %624 = vector.broadcast %cst_200 : f32 to vector<6x128xf32>
    %625 = arith.subf %602, %624 : vector<6x128xf32>
    %626 = arith.mulf %625, %579 : vector<6x128xf32>
    %cst_201 = arith.constant 2.33333325 : f32
    %627 = vector.broadcast %cst_201 : f32 to vector<6x128xf32>
    %628 = arith.subf %627, %602 : vector<6x128xf32>
    %629 = arith.mulf %628, %586 : vector<6x128xf32>
    %630 = arith.addf %626, %629 : vector<6x128xf32>
    %cst_202 = arith.constant 1.33333337 : f32
    %631 = vector.broadcast %cst_202 : f32 to vector<6x128xf32>
    %632 = arith.subf %602, %631 : vector<6x128xf32>
    %633 = arith.mulf %632, %586 : vector<6x128xf32>
    %cst_203 = arith.constant 2.66666675 : f32
    %634 = vector.broadcast %cst_203 : f32 to vector<6x128xf32>
    %635 = arith.subf %634, %602 : vector<6x128xf32>
    %636 = arith.mulf %635, %593 : vector<6x128xf32>
    %637 = arith.addf %633, %636 : vector<6x128xf32>
    %cst_204 = arith.constant 1.66666663 : f32
    %638 = vector.broadcast %cst_204 : f32 to vector<6x128xf32>
    %639 = arith.subf %602, %638 : vector<6x128xf32>
    %640 = arith.mulf %639, %593 : vector<6x128xf32>
    %cst_205 = arith.constant 3.000000e+00 : f32
    %641 = vector.broadcast %cst_205 : f32 to vector<6x128xf32>
    %642 = arith.subf %641, %602 : vector<6x128xf32>
    %643 = arith.mulf %642, %600 : vector<6x128xf32>
    %644 = arith.addf %640, %643 : vector<6x128xf32>
    %c0_206 = arith.constant 0 : index
    %c0_207 = arith.constant 0 : index
    %645 = vector.load %arg6[%c0_206, %c0_207] : memref<48x128xf32, #tpu.memory_space<vmem>>, vector<6x128xf32>
    tpu.vector_store %arg6[%c0_206, %c0_207], %609 {strides = array<i32>} : memref<48x128xf32, #tpu.memory_space<vmem>>, vector<6x128xf32>,
    %c8_208 = arith.constant 8 : index
    %c0_209 = arith.constant 0 : index
    %646 = vector.load %arg6[%c8_208, %c0_209] : memref<48x128xf32, #tpu.memory_space<vmem>>, vector<6x128xf32>
    tpu.vector_store %arg6[%c8_208, %c0_209], %616 {strides = array<i32>} : memref<48x128xf32, #tpu.memory_space<vmem>>, vector<6x128xf32>,
    %c16_210 = arith.constant 16 : index
    %c0_211 = arith.constant 0 : index
    %647 = vector.load %arg6[%c16_210, %c0_211] : memref<48x128xf32, #tpu.memory_space<vmem>>, vector<6x128xf32>
    tpu.vector_store %arg6[%c16_210, %c0_211], %623 {strides = array<i32>} : memref<48x128xf32, #tpu.memory_space<vmem>>, vector<6x128xf32>,
    %c24_212 = arith.constant 24 : index
    %c0_213 = arith.constant 0 : index
    %648 = vector.load %arg6[%c24_212, %c0_213] : memref<48x128xf32, #tpu.memory_space<vmem>>, vector<6x128xf32>
    tpu.vector_store %arg6[%c24_212, %c0_213], %630 {strides = array<i32>} : memref<48x128xf32, #tpu.memory_space<vmem>>, vector<6x128xf32>,
    %c32_214 = arith.constant 32 : index
    %c0_215 = arith.constant 0 : index
    %649 = vector.load %arg6[%c32_214, %c0_215] : memref<48x128xf32, #tpu.memory_space<vmem>>, vector<6x128xf32>
    tpu.vector_store %arg6[%c32_214, %c0_215], %637 {strides = array<i32>} : memref<48x128xf32, #tpu.memory_space<vmem>>, vector<6x128xf32>,
    %c40_216 = arith.constant 40 : index
    %c0_217 = arith.constant 0 : index
    %650 = vector.load %arg6[%c40_216, %c0_217] : memref<48x128xf32, #tpu.memory_space<vmem>>, vector<6x128xf32>
    tpu.vector_store %arg6[%c40_216, %c0_217], %644 {strides = array<i32>} : memref<48x128xf32, #tpu.memory_space<vmem>>, vector<6x128xf32>,
    %c0_218 = arith.constant 0 : index
    %c0_219 = arith.constant 0 : index
    %651 = vector.load %arg6[%c0_218, %c0_219] : memref<48x128xf32, #tpu.memory_space<vmem>>, vector<48x128xf32>
    %c0_220 = arith.constant 0 : index
    %c0_221 = arith.constant 0 : index
    %652 = vector.load %arg4[%c0_220, %c0_221] : memref<1x48xf32, #tpu.memory_space<vmem>>, vector<1x48xf32>
    %cst_222 = arith.constant dense<0.000000e+00> : vector<1x128xf32>
    %653 = tpu.matmul %652, %651, %cst_222 {dimension_numbers = #tpu.dot_dimension_numbers<[1], [0], [0], [1], [0, 0, 1, 1], [], []>} : vector<1x48xf32>, vector<48x128xf32>, vector<1x128xf32> -> vector<1x128xf32>
    %c0_223 = arith.constant 0 : index
    %c0_224 = arith.constant 0 : index
    %654 = vector.load %arg5[%c0_223, %c0_224] : memref<1x128xf32, #tpu.memory_space<vmem>>, vector<1x128xf32>
    tpu.vector_store %arg5[%c0_223, %c0_224], %653 {strides = array<i32>} : memref<1x128xf32, #tpu.memory_space<vmem>>, vector<1x128xf32>,
    return
  }
  func.func @transform_0(%arg0: i32) -> (i32, i32) {
    %c0_i32 = arith.constant 0 : i32
    %c0_i32_0 = arith.constant 0 : i32
    return %c0_i32, %arg0 : i32, i32
  }
  func.func @transform_1(%arg0: i32) -> (i32, i32) {
    %c0_i32 = arith.constant 0 : i32
    %c0_i32_0 = arith.constant 0 : i32
    %c0_i32_1 = arith.constant 0 : i32
    return %c0_i32, %c0_i32_0 : i32, i32
  }
  func.func @transform_2(%arg0: i32) -> (i32, i32) {
    %c0_i32 = arith.constant 0 : i32
    %c0_i32_0 = arith.constant 0 : i32
    %c0_i32_1 = arith.constant 0 : i32
    return %c0_i32, %c0_i32_0 : i32, i32
  }
  func.func @transform_3(%arg0: i32) -> (i32, i32) {
    %c0_i32 = arith.constant 0 : i32
    %c0_i32_0 = arith.constant 0 : i32
    %c0_i32_1 = arith.constant 0 : i32
    return %c0_i32, %c0_i32_0 : i32, i32
  }
  func.func @transform_4(%arg0: i32) -> (i32, i32) {
    %c0_i32 = arith.constant 0 : i32
    %c0_i32_0 = arith.constant 0 : i32
    return %c0_i32, %arg0 : i32, i32
  }
}

</mosaic_0001>

<llo_original>
// kernel: tpu_custom_call.1
$region0: #{tpu_custom_call.1}
  #allocation0 [shape = 'u32[]', space=smem, size = 0x4, offset = 0x4, fixed_abs, tag = 'smem constant byte address 0x4 - core index']
  #allocation1 [shape = 'u32[72,128]{1,0:T(1,128)}', space=vmem, size = 0x9000, scoped, tag = 'internal scratch']
  #allocation2 [shape = 'f32[48,128]{1,0:T(8,128)}', space=vmem, size = 0x6000, scoped, tag = 'scratch operand']
  %s0 = inlined_call_operand.hbm [shape: f32[4,384], index: 0, kind: input, shape index: {}]
  %s1 = inlined_call_operand.hbm [shape: f32[8,48], index: 1, kind: input, shape index: {}]
  %s2 = inlined_call_operand.hbm [shape: f32[6,48], index: 2, kind: input, shape index: {}]
  %s3 = inlined_call_operand.vmem [shape: f32[1,48], index: 3, kind: input, shape index: {}]
  %s4 = inlined_call_operand.hbm [shape: f32[1,384], index: 4, kind: output, shape index: {}]
  %s5 = sld [smem:[#allocation0]]
  $region61: #{tpu_custom_call.1} parent=0
    _
  %s7 = ssub.s32 1, %s5
  %s8 = scalar_select 0, %s7, %s5
  $region1: #{tpu_custom_call.1} parent=0
    #allocation3 [shape = 'u8[4096]{0}', space=vmem, size = 0x1000, scoped, tag = 'input window, operand 0']
    #allocation4 [shape = 's32[2]{0}', space=sflag, size = 0x8, scoped, tag = 'scoped memory for tpu_custom_call.1']
    #allocation5 [shape = 's32[2]{0}', space=sflag, size = 0x8, scoped, tag = 'scoped memory for tpu_custom_call.1']
    #allocation6 [shape = 'u8[4096]{0}', space=vmem, size = 0x1000, scoped, tag = 'input window, operand 1, single buffered']
    #allocation7 [shape = 's32[1]{0}', space=sflag, size = 0x4, scoped, tag = 'scoped memory for tpu_custom_call.1']
    #allocation8 [shape = 'u8[4096]{0}', space=vmem, size = 0x1000, scoped, tag = 'input window, operand 2, single buffered']
    #allocation9 [shape = 'u8[1024]{0}', space=vmem, size = 0x400, scoped, tag = 'output window, operand 0']
    %9 = vsyncpa [#allocation4], 0
    %s10 = scalar_lea.sflag [#allocation4], 1
    %11 = vsyncpa %s10, 0
    %12 = vsyncpa [#allocation7], 0
    %13 = vsyncpa [#allocation5], 0
    %s14 = scalar_lea.sflag [#allocation5], 1
    %15 = vsyncpa %s14, 0
    loop: start=0, step=1, limit=5
    $region2: #{tpu_custom_call.1} parent=1 // loop_pre_header
      _
    $region3: #{tpu_custom_call.1} parent=1 // loop_header
      %s17 = sphi 0, %s21
      %p18 = scmp.ge.s32.totalorder %s17, 5
      %s27 = sphi 0, %s29
      %s30 = sphi 0, %s27
      %s31 = sphi 0, %s30
      %s47 = sphi 0, %s31
      %s51 = sphi 0, %s51
      %s53 = sphi 0, %s51
      %s54 = sphi 0, %s53
      %s68 = sphi 0, %s54
      %s72 = sphi 0, %s72
      %s74 = sphi 0, %s72
      %s75 = sphi 0, %s74
      %s89 = sphi 0, %s75
      %s93 = sphi 0, %s93
      %s95 = sphi 0, %s93
      %s96 = sphi 0, %s95
      %s110 = sphi 0, %s96
      %s116 = sphi 0, %s118
      %s119 = sphi 0, %s116
      %s120 = sphi 0, %s119
      %s136 = sphi 0, %s120
    $region4: #{tpu_custom_call.1} parent=1 // loop_header_branch
      %20 = sbr.rel (%p18) target = $region8
    $region5: #{tpu_custom_call.1} parent=1 // loop_body
      %s22 = ssub.s32 %s17, 1
      %s23 = ssub.s32 %s17, 2
      %s24 = sadd.s32 %s17, 1
      %s25 = ssub.s32 %s17, %s24
      %p26 = scmp.eq.s32.totalorder %s25, 0
      %s28 = sadd.s32 %s27, 1
      %s29 = scalar_select %p26, %s27, %s28
      %p32 = pneg %p26
      %p33 = scmp.eq.s32.totalorder %s17, 2
      %p34 = por %p32, %p33
      %p35 = scmp.ne.s32.totalorder %s27, %s30
      %p36 = scmp.eq.s32.totalorder %s17, 0
      %p37 = por %p35, %p36
      %p38 = scmp.ne.s32.totalorder %s27, %s30
      %p39 = scmp.eq.s32.totalorder %s22, 2
      %p40 = por %p38, %p39
      %p41 = scmp.ne.s32.totalorder %s30, %s31
      %p42 = scmp.eq.s32.totalorder %s22, 0
      %p43 = por %p41, %p42
      %p44 = scmp.ne.s32.totalorder %s30, %s31
      %p45 = scmp.eq.s32.totalorder %s23, 2
      %p46 = por %p44, %p45
      %p48 = scmp.ne.s32.totalorder %s31, %s47
      %p49 = scmp.eq.s32.totalorder %s23, 0
      %p50 = por %p48, %p49
      %s52 = sadd.s32 %s51, 1
      %p55 = scmp.eq.s32.totalorder %s17, 2
      %p56 = scmp.ne.s32.totalorder %s51, %s53
      %p57 = scmp.eq.s32.totalorder %s17, 0
      %p58 = por %p56, %p57
      %p59 = scmp.ne.s32.totalorder %s51, %s53
      %p60 = scmp.eq.s32.totalorder %s22, 2
      %p61 = por %p59, %p60
      %p62 = scmp.ne.s32.totalorder %s53, %s54
      %p63 = scmp.eq.s32.totalorder %s22, 0
      %p64 = por %p62, %p63
      %p65 = scmp.ne.s32.totalorder %s53, %s54
      %p66 = scmp.eq.s32.totalorder %s23, 2
      %p67 = por %p65, %p66
      %p69 = scmp.ne.s32.totalorder %s54, %s68
      %p70 = scmp.eq.s32.totalorder %s23, 0
      %p71 = por %p69, %p70
      %s73 = sadd.s32 %s72, 1
      %p76 = scmp.eq.s32.totalorder %s17, 2
      %p77 = scmp.ne.s32.totalorder %s72, %s74
      %p78 = scmp.eq.s32.totalorder %s17, 0
      %p79 = por %p77, %p78
      %p80 = scmp.ne.s32.totalorder %s72, %s74
      %p81 = scmp.eq.s32.totalorder %s22, 2
      %p82 = por %p80, %p81
      %p83 = scmp.ne.s32.totalorder %s74, %s75
      %p84 = scmp.eq.s32.totalorder %s22, 0
      %p85 = por %p83, %p84
      %p86 = scmp.ne.s32.totalorder %s74, %s75
      %p87 = scmp.eq.s32.totalorder %s23, 2
      %p88 = por %p86, %p87
      %p90 = scmp.ne.s32.totalorder %s75, %s89
      %p91 = scmp.eq.s32.totalorder %s23, 0
      %p92 = por %p90, %p91
      %s94 = sadd.s32 %s93, 1
      %p97 = scmp.eq.s32.totalorder %s17, 2
      %p98 = scmp.ne.s32.totalorder %s93, %s95
      %p99 = scmp.eq.s32.totalorder %s17, 0
      %p100 = por %p98, %p99
      %p101 = scmp.ne.s32.totalorder %s93, %s95
      %p102 = scmp.eq.s32.totalorder %s22, 2
      %p103 = por %p101, %p102
      %p104 = scmp.ne.s32.totalorder %s95, %s96
      %p105 = scmp.eq.s32.totalorder %s22, 0
      %p106 = por %p104, %p105
      %p107 = scmp.ne.s32.totalorder %s95, %s96
      %p108 = scmp.eq.s32.totalorder %s23, 2
      %p109 = por %p107, %p108
      %p111 = scmp.ne.s32.totalorder %s96, %s110
      %p112 = scmp.eq.s32.totalorder %s23, 0
      %p113 = por %p111, %p112
      %s114 = ssub.s32 %s17, %s24
      %p115 = scmp.eq.s32.totalorder %s114, 0
      %s117 = sadd.s32 %s116, 1
      %s118 = scalar_select %p115, %s116, %s117
      %p121 = pneg %p115
      %p122 = scmp.eq.s32.totalorder %s17, 2
      %p123 = por %p121, %p122
      %p124 = scmp.ne.s32.totalorder %s116, %s119
      %p125 = scmp.eq.s32.totalorder %s17, 0
      %p126 = por %p124, %p125
      %p127 = scmp.ne.s32.totalorder %s116, %s119
      %p128 = scmp.eq.s32.totalorder %s22, 2
      %p129 = por %p127, %p128
      %p130 = scmp.ne.s32.totalorder %s119, %s120
      %p131 = scmp.eq.s32.totalorder %s22, 0
      %p132 = por %p130, %p131
      %p133 = scmp.ne.s32.totalorder %s119, %s120
      %p134 = scmp.eq.s32.totalorder %s23, 2
      %p135 = por %p133, %p134
      %p137 = scmp.ne.s32.totalorder %s120, %s136
      %p138 = scmp.eq.s32.totalorder %s23, 0
      %p139 = por %p137, %p138
      %p140 = scmp.le.s32.totalorder 1, %s17
      %p141 = scmp.lt.s32.totalorder %s17, 4
      %p142 = pnand %p140, %p141
      %p143 = pneg %p142
      // Predicated region
      $region9: #{tpu_custom_call.1} parent=5 // pred_check
        _
      $region10: #{tpu_custom_call.1} parent=5 // pred_check_branch
        %145 = sbr.rel (%p142) target = $region12
      $region11: #{tpu_custom_call.1} parent=5 // pred_region
        %s146 = ssub.s32 %s17, 1
        // Predicated region
        $region13: #{tpu_custom_call.1} parent=11 // pred_check
          %p147 = pneg %p64
        $region14: #{tpu_custom_call.1} parent=11 // pred_check_branch
          %149 = sbr.rel (%p147) target = $region16
        $region15: #{tpu_custom_call.1} parent=11 // pred_region
          %151 = vsyncadd [#allocation7], 0
          %s153 = sshll.u32 %s1, 4
          %s154 = int_to_ptr.hbm [resolvable:$true] %s153
          %s155 = sshll.u32 [#allocation6], 4
          %s156 = int_to_ptr.vmem [resolvable:$true] %s155
          %158 = dma.hbm_to_vmem [thread:$0]  %s154, 128, %s156, [#allocation7]
        $region16: #{tpu_custom_call.1} parent=11 // pred_fallthru
          _
        // Predicated region
        $region17: #{tpu_custom_call.1} parent=11 // pred_check
          %p159 = pneg %p85
        $region18: #{tpu_custom_call.1} parent=11 // pred_check_branch
          %161 = sbr.rel (%p159) target = $region20
        $region19: #{tpu_custom_call.1} parent=11 // pred_region
          %163 = vsyncadd [#allocation7], 0
          %s165 = sshll.u32 %s2, 4
          %s166 = int_to_ptr.hbm [resolvable:$true] %s165
          %s167 = sshll.u32 [#allocation8], 4
          %s168 = int_to_ptr.vmem [resolvable:$true] %s167
          %170 = dma.hbm_to_vmem [thread:$0]  %s166, 128, %s168, [#allocation7]
        $region20: #{tpu_custom_call.1} parent=11 // pred_fallthru
          _
        // Predicated region
        $region21: #{tpu_custom_call.1} parent=11 // pred_check
          %p171 = pneg %p106
        $region22: #{tpu_custom_call.1} parent=11 // pred_check_branch
          %173 = sbr.rel (%p171) target = $region24
        $region23: #{tpu_custom_call.1} parent=11 // pred_region
          _
        $region24: #{tpu_custom_call.1} parent=11 // pred_fallthru
          _
      $region12: #{tpu_custom_call.1} parent=5 // pred_fallthru
        _
      %p174 = scmp.lt.s32.totalorder %s17, 3
      // Predicated region
      $region25: #{tpu_custom_call.1} parent=5 // pred_check
        %p175 = pneg %p174
      $region26: #{tpu_custom_call.1} parent=5 // pred_check_branch
        %177 = sbr.rel (%p175) target = $region28
      $region27: #{tpu_custom_call.1} parent=5 // pred_region
        // Predicated region
        $region29: #{tpu_custom_call.1} parent=27 // pred_check
          %p178 = pneg %p37
        $region30: #{tpu_custom_call.1} parent=27 // pred_check_branch
          %180 = sbr.rel (%p178) target = $region32
        $region31: #{tpu_custom_call.1} parent=27 // pred_region
          %s181 = sand.u32 %s27, 1
          %s182 = scalar_lea.sflag [#allocation4], %s181
          %s183 = sand.u32 %s27, 1
          %s184 = smul.addr %s183, 4
          %s185 = scalar_lea.vmem [#allocation3], %s184
          %187 = vsyncadd %s182, 0
          %s188 = smul.addr %s17, 4
          %s189 = scalar_lea.hbm %s0, %s188
          %s191 = sshll.u32 %s189, 4
          %s192 = int_to_ptr.hbm [resolvable:$true] %s191
          %s193 = sshll.u32 %s185, 4
          %s194 = int_to_ptr.vmem [resolvable:$true] %s193
          %196 = dma.hbm_to_vmem [thread:$0]  %s192, 64, %s194, %s182
        $region32: #{tpu_custom_call.1} parent=27 // pred_fallthru
          _
      $region28: #{tpu_custom_call.1} parent=5 // pred_fallthru
        _
      %p197 = scmp.le.s32.totalorder 1, %s17
      %p198 = scmp.lt.s32.totalorder %s17, 4
      %p199 = pnand %p197, %p198
      %p200 = pneg %p199
      // Predicated region
      $region33: #{tpu_custom_call.1} parent=5 // pred_check
        _
      $region34: #{tpu_custom_call.1} parent=5 // pred_check_branch
        %202 = sbr.rel (%p199) target = $region36
      $region35: #{tpu_custom_call.1} parent=5 // pred_region
        %s203 = ssub.s32 %s17, 1
        %s204 = sand.u32 %s30, 1
        %s205 = scalar_lea.sflag [#allocation4], %s204
        %s206 = sand.u32 %s30, 1
        %s207 = smul.addr %s206, 4
        %s208 = scalar_lea.vmem [#allocation3], %s207
        // Predicated region
        $region37: #{tpu_custom_call.1} parent=35 // pred_check
          %p209 = pneg %p43
        $region38: #{tpu_custom_call.1} parent=35 // pred_check_branch
          %211 = sbr.rel (%p209) target = $region40
        $region39: #{tpu_custom_call.1} parent=35 // pred_region
          %213 = dma.done %s205, 64
        $region40: #{tpu_custom_call.1} parent=35 // pred_fallthru
          _
        // Predicated region
        $region41: #{tpu_custom_call.1} parent=35 // pred_check
          %p214 = pneg %p64
        $region42: #{tpu_custom_call.1} parent=35 // pred_check_branch
          %216 = sbr.rel (%p214) target = $region44
        $region43: #{tpu_custom_call.1} parent=35 // pred_region
          %218 = dma.done [#allocation7], 128
        $region44: #{tpu_custom_call.1} parent=35 // pred_fallthru
          _
        // Predicated region
        $region45: #{tpu_custom_call.1} parent=35 // pred_check
          %p219 = pneg %p85
        $region46: #{tpu_custom_call.1} parent=35 // pred_check_branch
          %221 = sbr.rel (%p219) target = $region48
        $region47: #{tpu_custom_call.1} parent=35 // pred_region
          %223 = dma.done [#allocation7], 128
        $region48: #{tpu_custom_call.1} parent=35 // pred_fallthru
          _
        %s224 = sand.u32 %s30, 1
        %s225 = scalar_lea.sflag [#allocation4], %s224
        %s226 = sand.u32 %s30, 1
        %s227 = smul.addr %s226, 4
        %s228 = scalar_lea.vmem [#allocation3], %s227
        %p229 = pneg %p43
        %p230 = pneg %p40
        %p231 = pneg %p64
        %p232 = pneg %p61
        %p233 = pneg %p85
        %p234 = pneg %p82
        %p235 = pneg %p106
        %p236 = pneg %p103
        %p237 = pneg %p132
        %p238 = pneg %p129
        %s239 = sand.u32 %s119, 1
        %s240 = scalar_lea.sflag [#allocation5], %s239
        %s241 = sand.u32 %s119, 1
        %s242 = scalar_lea.vmem [#allocation9], %s241
        %243 = vst [vmem:[#allocation2] sm:$0xff] 0.0
        %244 = vst [vmem:[#allocation2 + $0x8] sm:$0xff] 0.0
        %245 = vst [vmem:[#allocation2 + $0x10] sm:$0xff] 0.0
        %246 = vst [vmem:[#allocation2 + $0x18] sm:$0xff] 0.0
        %247 = vst [vmem:[#allocation2 + $0x20] sm:$0xff] 0.0
        %248 = vst [vmem:[#allocation2 + $0x28] sm:$0xff] 0.0
        %v249 = vld [vmem:[%s208] sm:$0xf]
        %vm250 = vcmp.ge.f32.partialorder %v249, 0.0
        %v251 = vsel %vm250, 1, 0
        %v252 = vcvt.s32.f32 %v251
        %vm253 = vcmp.ge.f32.partialorder %v249, 0.11111111
        %v254 = vsel %vm253, 1, 0
        %v255 = vcvt.s32.f32 %v254
        %vm256 = vcmp.ge.f32.partialorder %v249, 0.22222222
        %v257 = vsel %vm256, 1, 0
        %v258 = vcvt.s32.f32 %v257
        %vm259 = vcmp.ge.f32.partialorder %v249, 0.33333334
        %v260 = vsel %vm259, 1, 0
        %v261 = vcvt.s32.f32 %v260
        %vm262 = vcmp.ge.f32.partialorder %v249, 0.44444445
        %v263 = vsel %vm262, 1, 0
        %v264 = vcvt.s32.f32 %v263
        %vm265 = vcmp.ge.f32.partialorder %v249, 0.5555556
        %v266 = vsel %vm265, 1, 0
        %v267 = vcvt.s32.f32 %v266
        %vm268 = vcmp.ge.f32.partialorder %v249, 0.6666667
        %v269 = vsel %vm268, 1, 0
        %v270 = vcvt.s32.f32 %v269
        %vm271 = vcmp.ge.f32.partialorder %v249, 0.7777778
        %v272 = vsel %vm271, 1, 0
        %v273 = vcvt.s32.f32 %v272
        %vm274 = vcmp.ge.f32.partialorder %v249, 0.8888889
        %v275 = vsel %vm274, 1, 0
        %v276 = vcvt.s32.f32 %v275
        %vm277 = vcmp.ge.f32.partialorder %v249, 1.0
        %v278 = vsel %vm277, 1, 0
        %v279 = vcvt.s32.f32 %v278
        %v280 = vsub.f32 %v252, %v255
        %v281 = vsub.f32 %v255, %v258
        %v282 = vsub.f32 %v258, %v261
        %v283 = vsub.f32 %v261, %v264
        %v284 = vsub.f32 %v264, %v267
        %v285 = vsub.f32 %v267, %v270
        %v286 = vsub.f32 %v270, %v273
        %v287 = vsub.f32 %v273, %v276
        %v288 = vsub.f32 %v276, %v279
        %v289 = vmul.f32 %v249, 9.0
        %v290 = vmul.f32 %v289, %v280
        %v291 = vsub.f32 2.0, %v289
        %v292 = vmul.f32 %v291, %v281
        %v293 = vadd.f32 %v290, %v292
        %v294 = vsub.f32 %v289, 1.0
        %v295 = vmul.f32 %v294, %v281
        %v296 = vsub.f32 3.0, %v289
        %v297 = vmul.f32 %v296, %v282
        %v298 = vadd.f32 %v295, %v297
        %v299 = vsub.f32 %v289, 2.0
        %v300 = vmul.f32 %v299, %v282
        %v301 = vsub.f32 4.0, %v289
        %v302 = vmul.f32 %v301, %v283
        %v303 = vadd.f32 %v300, %v302
        %v304 = vsub.f32 %v289, 3.0
        %v305 = vmul.f32 %v304, %v283
        %v306 = vsub.f32 5.0, %v289
        %v307 = vmul.f32 %v306, %v284
        %v308 = vadd.f32 %v305, %v307
        %v309 = vsub.f32 %v289, 4.0
        %v310 = vmul.f32 %v309, %v284
        %v311 = vsub.f32 6.0, %v289
        %v312 = vmul.f32 %v311, %v285
        %v313 = vadd.f32 %v310, %v312
        %v314 = vsub.f32 %v289, 5.0
        %v315 = vmul.f32 %v314, %v285
        %v316 = vsub.f32 7.0, %v289
        %v317 = vmul.f32 %v316, %v286
        %v318 = vadd.f32 %v315, %v317
        %v319 = vsub.f32 %v289, 6.0
        %v320 = vmul.f32 %v319, %v286
        %v321 = vsub.f32 8.0, %v289
        %v322 = vmul.f32 %v321, %v287
        %v323 = vadd.f32 %v320, %v322
        %v324 = vsub.f32 %v289, 7.0
        %v325 = vmul.f32 %v324, %v287
        %v326 = vsub.f32 9.0, %v289
        %v327 = vmul.f32 %v326, %v288
        %v328 = vadd.f32 %v325, %v327
        %v329 = vmul.f32 %v249, 4.5
        %v330 = vmul.f32 %v329, %v293
        %v331 = vsub.f32 1.5, %v329
        %v332 = vmul.f32 %v331, %v298
        %v333 = vadd.f32 %v330, %v332
        %v334 = vsub.f32 %v329, 0.5
        %v335 = vmul.f32 %v334, %v298
        %v336 = vsub.f32 2.0, %v329
        %v337 = vmul.f32 %v336, %v303
        %v338 = vadd.f32 %v335, %v337
        %v339 = vsub.f32 %v329, 1.0
        %v340 = vmul.f32 %v339, %v303
        %v341 = vsub.f32 2.5, %v329
        %v342 = vmul.f32 %v341, %v308
        %v343 = vadd.f32 %v340, %v342
        %v344 = vsub.f32 %v329, 1.5
        %v345 = vmul.f32 %v344, %v308
        %v346 = vsub.f32 3.0, %v329
        %v347 = vmul.f32 %v346, %v313
        %v348 = vadd.f32 %v345, %v347
        %v349 = vsub.f32 %v329, 2.0
        %v350 = vmul.f32 %v349, %v313
        %v351 = vsub.f32 3.5, %v329
        %v352 = vmul.f32 %v351, %v318
        %v353 = vadd.f32 %v350, %v352
        %v354 = vsub.f32 %v329, 2.5
        %v355 = vmul.f32 %v354, %v318
        %v356 = vsub.f32 4.0, %v329
        %v357 = vmul.f32 %v356, %v323
        %v358 = vadd.f32 %v355, %v357
        %v359 = vsub.f32 %v329, 3.0
        %v360 = vmul.f32 %v359, %v323
        %v361 = vsub.f32 4.5, %v329
        %v362 = vmul.f32 %v361, %v328
        %v363 = vadd.f32 %v360, %v362
        %v364 = vmul.f32 %v249, 3.0
        %v365 = vmul.f32 %v364, %v333
        %v366 = vsub.f32 1.3333334, %v364
        %v367 = vmul.f32 %v366, %v338
        %v368 = vadd.f32 %v365, %v367
        %v369 = vsub.f32 %v364, 0.33333334
        %v370 = vmul.f32 %v369, %v338
        %v371 = vsub.f32 1.6666666, %v364
        %v372 = vmul.f32 %v371, %v343
        %v373 = vadd.f32 %v370, %v372
        %v374 = vsub.f32 %v364, 0.6666667
        %v375 = vmul.f32 %v374, %v343
        %v376 = vsub.f32 2.0, %v364
        %v377 = vmul.f32 %v376, %v348
        %v378 = vadd.f32 %v375, %v377
        %v379 = vsub.f32 %v364, 1.0
        %v380 = vmul.f32 %v379, %v348
        %v381 = vsub.f32 2.3333333, %v364
        %v382 = vmul.f32 %v381, %v353
        %v383 = vadd.f32 %v380, %v382
        %v384 = vsub.f32 %v364, 1.3333334
        %v385 = vmul.f32 %v384, %v353
        %v386 = vsub.f32 2.6666667, %v364
        %v387 = vmul.f32 %v386, %v358
        %v388 = vadd.f32 %v385, %v387
        %v389 = vsub.f32 %v364, 1.6666666
        %v390 = vmul.f32 %v389, %v358
        %v391 = vsub.f32 3.0, %v364
        %v392 = vmul.f32 %v391, %v363
        %v393 = vadd.f32 %v390, %v392
        %394 = vst [vmem:[#allocation2] sm:$0xf] %v368
        %395 = vst [vmem:[#allocation2 + $0x8] sm:$0xf] %v373
        %396 = vst [vmem:[#allocation2 + $0x10] sm:$0xf] %v378
        %397 = vst [vmem:[#allocation2 + $0x18] sm:$0xf] %v383
        %398 = vst [vmem:[#allocation2 + $0x20] sm:$0xf] %v388
        %399 = vst [vmem:[#allocation2 + $0x28] sm:$0xf] %v393
        %v400 = vld [vmem:[#allocation2] sm:$0xff]
        %v401 = vld [vmem:[#allocation2 + $0x8] sm:$0xff]
        %v402 = vld [vmem:[#allocation2 + $0x10] sm:$0xff]
        %v403 = vld [vmem:[#allocation2 + $0x18] sm:$0xff]
        %v404 = vld [vmem:[#allocation2 + $0x20] sm:$0xff]
        %v405 = vld [vmem:[#allocation2 + $0x28] sm:$0xff]
        %v406 = vld [vmem:[#allocation6] sm:$0xff]
        %vm407 = vcmask 392192
        %v409 = vsel %vm407, %v406, 0
        %411 = vmatpush.msra.mxu0 0.0
        %412 = vmatpush.msra.mxu0 0.0
        %413 = vmatpush.msra.mxu0 0.0
        %414 = vmatpush.msra.mxu0 0.0
        %415 = vmatpush.msra.mxu0 0.0
        %416 = vmatpush.msra.mxu0 0.0
        %417 = vmatpush.msra.mxu0 0.0
        %418 = vmatpush.msra.mxu0 0.0
        %419 = vmatpush.msra.mxu0 0.0
        %420 = vmatpush.msra.mxu0 0.0
        %421 = vmatpush.msra.mxu0 %v405
        %422 = vmatpush.msra.mxu0 %v404
        %423 = vmatpush.msra.mxu0 %v403
        %424 = vmatpush.msra.mxu0 %v402
        %425 = vmatpush.msra.mxu0 %v401
        %426 = vmatpush.msra.mxu0 %v400
        %427 = vmatmul.f32.gmra.mxu0 %v409
        %v428 = vpop.f32.mrf.mxu0
        %v429 = vadd.f32 0.0, %v428
        %430 = vdwg.mxu0
        %vm431 = vcmp.ge.f32.partialorder %v429, 0.0
        %v432 = vsel %vm431, 1, 0
        %v433 = vcvt.s32.f32 %v432
        %vm434 = vcmp.ge.f32.partialorder %v429, 0.11111111
        %v435 = vsel %vm434, 1, 0
        %v436 = vcvt.s32.f32 %v435
        %vm437 = vcmp.ge.f32.partialorder %v429, 0.22222222
        %v438 = vsel %vm437, 1, 0
        %v439 = vcvt.s32.f32 %v438
        %vm440 = vcmp.ge.f32.partialorder %v429, 0.33333334
        %v441 = vsel %vm440, 1, 0
        %v442 = vcvt.s32.f32 %v441
        %vm443 = vcmp.ge.f32.partialorder %v429, 0.44444445
        %v444 = vsel %vm443, 1, 0
        %v445 = vcvt.s32.f32 %v444
        %vm446 = vcmp.ge.f32.partialorder %v429, 0.5555556
        %v447 = vsel %vm446, 1, 0
        %v448 = vcvt.s32.f32 %v447
        %vm449 = vcmp.ge.f32.partialorder %v429, 0.6666667
        %v450 = vsel %vm449, 1, 0
        %v451 = vcvt.s32.f32 %v450
        %vm452 = vcmp.ge.f32.partialorder %v429, 0.7777778
        %v453 = vsel %vm452, 1, 0
        %v454 = vcvt.s32.f32 %v453
        %vm455 = vcmp.ge.f32.partialorder %v429, 0.8888889
        %v456 = vsel %vm455, 1, 0
        %v457 = vcvt.s32.f32 %v456
        %vm458 = vcmp.ge.f32.partialorder %v429, 1.0
        %v459 = vsel %vm458, 1, 0
        %v460 = vcvt.s32.f32 %v459
        %v461 = vsub.f32 %v433, %v436
        %v462 = vsub.f32 %v436, %v439
        %v463 = vsub.f32 %v439, %v442
        %v464 = vsub.f32 %v442, %v445
        %v465 = vsub.f32 %v445, %v448
        %v466 = vsub.f32 %v448, %v451
        %v467 = vsub.f32 %v451, %v454
        %v468 = vsub.f32 %v454, %v457
        %v469 = vsub.f32 %v457, %v460
        %v470 = vmul.f32 %v429, 9.0
        %v471 = vmul.f32 %v470, %v461
        %v472 = vsub.f32 2.0, %v470
        %v473 = vmul.f32 %v472, %v462
        %v474 = vadd.f32 %v471, %v473
        %v475 = vsub.f32 %v470, 1.0
        %v476 = vmul.f32 %v475, %v462
        %v477 = vsub.f32 3.0, %v470
        %v478 = vmul.f32 %v477, %v463
        %v479 = vadd.f32 %v476, %v478
        %v480 = vsub.f32 %v470, 2.0
        %v481 = vmul.f32 %v480, %v463
        %v482 = vsub.f32 4.0, %v470
        %v483 = vmul.f32 %v482, %v464
        %v484 = vadd.f32 %v481, %v483
        %v485 = vsub.f32 %v470, 3.0
        %v486 = vmul.f32 %v485, %v464
        %v487 = vsub.f32 5.0, %v470
        %v488 = vmul.f32 %v487, %v465
        %v489 = vadd.f32 %v486, %v488
        %v490 = vsub.f32 %v470, 4.0
        %v491 = vmul.f32 %v490, %v465
        %v492 = vsub.f32 6.0, %v470
        %v493 = vmul.f32 %v492, %v466
        %v494 = vadd.f32 %v491, %v493
        %v495 = vsub.f32 %v470, 5.0
        %v496 = vmul.f32 %v495, %v466
        %v497 = vsub.f32 7.0, %v470
        %v498 = vmul.f32 %v497, %v467
        %v499 = vadd.f32 %v496, %v498
        %v500 = vsub.f32 %v470, 6.0
        %v501 = vmul.f32 %v500, %v467
        %v502 = vsub.f32 8.0, %v470
        %v503 = vmul.f32 %v502, %v468
        %v504 = vadd.f32 %v501, %v503
        %v505 = vsub.f32 %v470, 7.0
        %v506 = vmul.f32 %v505, %v468
        %v507 = vsub.f32 9.0, %v470
        %v508 = vmul.f32 %v507, %v469
        %v509 = vadd.f32 %v506, %v508
        %v510 = vmul.f32 %v429, 4.5
        %v511 = vmul.f32 %v510, %v474
        %v512 = vsub.f32 1.5, %v510
        %v513 = vmul.f32 %v512, %v479
        %v514 = vadd.f32 %v511, %v513
        %v515 = vsub.f32 %v510, 0.5
        %v516 = vmul.f32 %v515, %v479
        %v517 = vsub.f32 2.0, %v510
        %v518 = vmul.f32 %v517, %v484
        %v519 = vadd.f32 %v516, %v518
        %v520 = vsub.f32 %v510, 1.0
        %v521 = vmul.f32 %v520, %v484
        %v522 = vsub.f32 2.5, %v510
        %v523 = vmul.f32 %v522, %v489
        %v524 = vadd.f32 %v521, %v523
        %v525 = vsub.f32 %v510, 1.5
        %v526 = vmul.f32 %v525, %v489
        %v527 = vsub.f32 3.0, %v510
        %v528 = vmul.f32 %v527, %v494
        %v529 = vadd.f32 %v526, %v528
        %v530 = vsub.f32 %v510, 2.0
        %v531 = vmul.f32 %v530, %v494
        %v532 = vsub.f32 3.5, %v510
        %v533 = vmul.f32 %v532, %v499
        %v534 = vadd.f32 %v531, %v533
        %v535 = vsub.f32 %v510, 2.5
        %v536 = vmul.f32 %v535, %v499
        %v537 = vsub.f32 4.0, %v510
        %v538 = vmul.f32 %v537, %v504
        %v539 = vadd.f32 %v536, %v538
        %v540 = vsub.f32 %v510, 3.0
        %v541 = vmul.f32 %v540, %v504
        %v542 = vsub.f32 4.5, %v510
        %v543 = vmul.f32 %v542, %v509
        %v544 = vadd.f32 %v541, %v543
        %v545 = vmul.f32 %v429, 3.0
        %v546 = vmul.f32 %v545, %v514
        %v547 = vsub.f32 1.3333334, %v545
        %v548 = vmul.f32 %v547, %v519
        %v549 = vadd.f32 %v546, %v548
        %v550 = vsub.f32 %v545, 0.33333334
        %v551 = vmul.f32 %v550, %v519
        %v552 = vsub.f32 1.6666666, %v545
        %v553 = vmul.f32 %v552, %v524
        %v554 = vadd.f32 %v551, %v553
        %v555 = vsub.f32 %v545, 0.6666667
        %v556 = vmul.f32 %v555, %v524
        %v557 = vsub.f32 2.0, %v545
        %v558 = vmul.f32 %v557, %v529
        %v559 = vadd.f32 %v556, %v558
        %v560 = vsub.f32 %v545, 1.0
        %v561 = vmul.f32 %v560, %v529
        %v562 = vsub.f32 2.3333333, %v545
        %v563 = vmul.f32 %v562, %v534
        %v564 = vadd.f32 %v561, %v563
        %v565 = vsub.f32 %v545, 1.3333334
        %v566 = vmul.f32 %v565, %v534
        %v567 = vsub.f32 2.6666667, %v545
        %v568 = vmul.f32 %v567, %v539
        %v569 = vadd.f32 %v566, %v568
        %v570 = vsub.f32 %v545, 1.6666666
        %v571 = vmul.f32 %v570, %v539
        %v572 = vsub.f32 3.0, %v545
        %v573 = vmul.f32 %v572, %v544
        %v574 = vadd.f32 %v571, %v573
        %575 = vst [vmem:[#allocation2] sm:$0xff] %v549
        %576 = vst [vmem:[#allocation2 + $0x8] sm:$0xff] %v554
        %577 = vst [vmem:[#allocation2 + $0x10] sm:$0xff] %v559
        %578 = vst [vmem:[#allocation2 + $0x18] sm:$0xff] %v564
        %579 = vst [vmem:[#allocation2 + $0x20] sm:$0xff] %v569
        %580 = vst [vmem:[#allocation2 + $0x28] sm:$0xff] %v574
        %v581 = vld [vmem:[#allocation2] sm:$0xff]
        %v582 = vld [vmem:[#allocation2 + $0x8] sm:$0xff]
        %v583 = vld [vmem:[#allocation2 + $0x10] sm:$0xff]
        %v584 = vld [vmem:[#allocation2 + $0x18] sm:$0xff]
        %v585 = vld [vmem:[#allocation2 + $0x20] sm:$0xff]
        %v586 = vld [vmem:[#allocation2 + $0x28] sm:$0xff]
        %v587 = vld [vmem:[#allocation8] sm:$0x3f]
        %v589 = vsel %vm407, %v587, 0
        %591 = vmatpush.msra.mxu0 0.0
        %592 = vmatpush.msra.mxu0 0.0
        %593 = vmatpush.msra.mxu0 0.0
        %594 = vmatpush.msra.mxu0 0.0
        %595 = vmatpush.msra.mxu0 0.0
        %596 = vmatpush.msra.mxu0 0.0
        %597 = vmatpush.msra.mxu0 0.0
        %598 = vmatpush.msra.mxu0 0.0
        %599 = vmatpush.msra.mxu0 0.0
        %600 = vmatpush.msra.mxu0 0.0
        %601 = vmatpush.msra.mxu0 %v586
        %602 = vmatpush.msra.mxu0 %v585
        %603 = vmatpush.msra.mxu0 %v584
        %604 = vmatpush.msra.mxu0 %v583
        %605 = vmatpush.msra.mxu0 %v582
        %606 = vmatpush.msra.mxu0 %v581
        %607 = vmatmul.f32.gmra.mxu0 %v589
        %v608 = vpop.f32.mrf.mxu0
        %v609 = vadd.f32 0.0, %v608
        %610 = vdwg.mxu0
        %vm611 = vcmp.ge.f32.partialorder %v609, 0.0
        %v612 = vsel %vm611, 1, 0
        %v613 = vcvt.s32.f32 %v612
        %vm614 = vcmp.ge.f32.partialorder %v609, 0.11111111
        %v615 = vsel %vm614, 1, 0
        %v616 = vcvt.s32.f32 %v615
        %vm617 = vcmp.ge.f32.partialorder %v609, 0.22222222
        %v618 = vsel %vm617, 1, 0
        %v619 = vcvt.s32.f32 %v618
        %vm620 = vcmp.ge.f32.partialorder %v609, 0.33333334
        %v621 = vsel %vm620, 1, 0
        %v622 = vcvt.s32.f32 %v621
        %vm623 = vcmp.ge.f32.partialorder %v609, 0.44444445
        %v624 = vsel %vm623, 1, 0
        %v625 = vcvt.s32.f32 %v624
        %vm626 = vcmp.ge.f32.partialorder %v609, 0.5555556
        %v627 = vsel %vm626, 1, 0
        %v628 = vcvt.s32.f32 %v627
        %vm629 = vcmp.ge.f32.partialorder %v609, 0.6666667
        %v630 = vsel %vm629, 1, 0
        %v631 = vcvt.s32.f32 %v630
        %vm632 = vcmp.ge.f32.partialorder %v609, 0.7777778
        %v633 = vsel %vm632, 1, 0
        %v634 = vcvt.s32.f32 %v633
        %vm635 = vcmp.ge.f32.partialorder %v609, 0.8888889
        %v636 = vsel %vm635, 1, 0
        %v637 = vcvt.s32.f32 %v636
        %vm638 = vcmp.ge.f32.partialorder %v609, 1.0
        %v639 = vsel %vm638, 1, 0
        %v640 = vcvt.s32.f32 %v639
        %v641 = vsub.f32 %v613, %v616
        %v642 = vsub.f32 %v616, %v619
        %v643 = vsub.f32 %v619, %v622
        %v644 = vsub.f32 %v622, %v625
        %v645 = vsub.f32 %v625, %v628
        %v646 = vsub.f32 %v628, %v631
        %v647 = vsub.f32 %v631, %v634
        %v648 = vsub.f32 %v634, %v637
        %v649 = vsub.f32 %v637, %v640
        %v650 = vmul.f32 %v609, 9.0
        %v651 = vmul.f32 %v650, %v641
        %v652 = vsub.f32 2.0, %v650
        %v653 = vmul.f32 %v652, %v642
        %v654 = vadd.f32 %v651, %v653
        %v655 = vsub.f32 %v650, 1.0
        %v656 = vmul.f32 %v655, %v642
        %v657 = vsub.f32 3.0, %v650
        %v658 = vmul.f32 %v657, %v643
        %v659 = vadd.f32 %v656, %v658
        %v660 = vsub.f32 %v650, 2.0
        %v661 = vmul.f32 %v660, %v643
        %v662 = vsub.f32 4.0, %v650
        %v663 = vmul.f32 %v662, %v644
        %v664 = vadd.f32 %v661, %v663
        %v665 = vsub.f32 %v650, 3.0
        %v666 = vmul.f32 %v665, %v644
        %v667 = vsub.f32 5.0, %v650
        %v668 = vmul.f32 %v667, %v645
        %v669 = vadd.f32 %v666, %v668
        %v670 = vsub.f32 %v650, 4.0
        %v671 = vmul.f32 %v670, %v645
        %v672 = vsub.f32 6.0, %v650
        %v673 = vmul.f32 %v672, %v646
        %v674 = vadd.f32 %v671, %v673
        %v675 = vsub.f32 %v650, 5.0
        %v676 = vmul.f32 %v675, %v646
        %v677 = vsub.f32 7.0, %v650
        %v678 = vmul.f32 %v677, %v647
        %v679 = vadd.f32 %v676, %v678
        %v680 = vsub.f32 %v650, 6.0
        %v681 = vmul.f32 %v680, %v647
        %v682 = vsub.f32 8.0, %v650
        %v683 = vmul.f32 %v682, %v648
        %v684 = vadd.f32 %v681, %v683
        %v685 = vsub.f32 %v650, 7.0
        %v686 = vmul.f32 %v685, %v648
        %v687 = vsub.f32 9.0, %v650
        %v688 = vmul.f32 %v687, %v649
        %v689 = vadd.f32 %v686, %v688
        %v690 = vmul.f32 %v609, 4.5
        %v691 = vmul.f32 %v690, %v654
        %v692 = vsub.f32 1.5, %v690
        %v693 = vmul.f32 %v692, %v659
        %v694 = vadd.f32 %v691, %v693
        %v695 = vsub.f32 %v690, 0.5
        %v696 = vmul.f32 %v695, %v659
        %v697 = vsub.f32 2.0, %v690
        %v698 = vmul.f32 %v697, %v664
        %v699 = vadd.f32 %v696, %v698
        %v700 = vsub.f32 %v690, 1.0
        %v701 = vmul.f32 %v700, %v664
        %v702 = vsub.f32 2.5, %v690
        %v703 = vmul.f32 %v702, %v669
        %v704 = vadd.f32 %v701, %v703
        %v705 = vsub.f32 %v690, 1.5
        %v706 = vmul.f32 %v705, %v669
        %v707 = vsub.f32 3.0, %v690
        %v708 = vmul.f32 %v707, %v674
        %v709 = vadd.f32 %v706, %v708
        %v710 = vsub.f32 %v690, 2.0
        %v711 = vmul.f32 %v710, %v674
        %v712 = vsub.f32 3.5, %v690
        %v713 = vmul.f32 %v712, %v679
        %v714 = vadd.f32 %v711, %v713
        %v715 = vsub.f32 %v690, 2.5
        %v716 = vmul.f32 %v715, %v679
        %v717 = vsub.f32 4.0, %v690
        %v718 = vmul.f32 %v717, %v684
        %v719 = vadd.f32 %v716, %v718
        %v720 = vsub.f32 %v690, 3.0
        %v721 = vmul.f32 %v720, %v684
        %v722 = vsub.f32 4.5, %v690
        %v723 = vmul.f32 %v722, %v689
        %v724 = vadd.f32 %v721, %v723
        %v725 = vmul.f32 %v609, 3.0
        %v726 = vmul.f32 %v725, %v694
        %v727 = vsub.f32 1.3333334, %v725
        %v728 = vmul.f32 %v727, %v699
        %v729 = vadd.f32 %v726, %v728
        %v730 = vsub.f32 %v725, 0.33333334
        %v731 = vmul.f32 %v730, %v699
        %v732 = vsub.f32 1.6666666, %v725
        %v733 = vmul.f32 %v732, %v704
        %v734 = vadd.f32 %v731, %v733
        %v735 = vsub.f32 %v725, 0.6666667
        %v736 = vmul.f32 %v735, %v704
        %v737 = vsub.f32 2.0, %v725
        %v738 = vmul.f32 %v737, %v709
        %v739 = vadd.f32 %v736, %v738
        %v740 = vsub.f32 %v725, 1.0
        %v741 = vmul.f32 %v740, %v709
        %v742 = vsub.f32 2.3333333, %v725
        %v743 = vmul.f32 %v742, %v714
        %v744 = vadd.f32 %v741, %v743
        %v745 = vsub.f32 %v725, 1.3333334
        %v746 = vmul.f32 %v745, %v714
        %v747 = vsub.f32 2.6666667, %v725
        %v748 = vmul.f32 %v747, %v719
        %v749 = vadd.f32 %v746, %v748
        %v750 = vsub.f32 %v725, 1.6666666
        %v751 = vmul.f32 %v750, %v719
        %v752 = vsub.f32 3.0, %v725
        %v753 = vmul.f32 %v752, %v724
        %v754 = vadd.f32 %v751, %v753
        %755 = vst [vmem:[#allocation2] sm:$0x3f] %v729
        %756 = vst [vmem:[#allocation2 + $0x8] sm:$0x3f] %v734
        %757 = vst [vmem:[#allocation2 + $0x10] sm:$0x3f] %v739
        %758 = vst [vmem:[#allocation2 + $0x18] sm:$0x3f] %v744
        %759 = vst [vmem:[#allocation2 + $0x20] sm:$0x3f] %v749
        %760 = vst [vmem:[#allocation2 + $0x28] sm:$0x3f] %v754
        %v761 = vld [vmem:[#allocation2] sm:$0xff]
        %v762 = vld [vmem:[#allocation2 + $0x8] sm:$0xff]
        %v763 = vld [vmem:[#allocation2 + $0x10] sm:$0xff]
        %v764 = vld [vmem:[#allocation2 + $0x18] sm:$0xff]
        %v765 = vld [vmem:[#allocation2 + $0x20] sm:$0xff]
        %v766 = vld [vmem:[#allocation2 + $0x28] sm:$0xff]
        %v767 = vld [vmem:[%s3] sm:$0x1]
        %v769 = vsel %vm407, %v767, 0
        %771 = vmatpush.msra.mxu0 0.0
        %772 = vmatpush.msra.mxu0 0.0
        %773 = vmatpush.msra.mxu0 0.0
        %774 = vmatpush.msra.mxu0 0.0
        %775 = vmatpush.msra.mxu0 0.0
        %776 = vmatpush.msra.mxu0 0.0
        %777 = vmatpush.msra.mxu0 0.0
        %778 = vmatpush.msra.mxu0 0.0
        %779 = vmatpush.msra.mxu0 0.0
        %780 = vmatpush.msra.mxu0 0.0
        %781 = vmatpush.msra.mxu0 %v766
        %782 = vmatpush.msra.mxu0 %v765
        %783 = vmatpush.msra.mxu0 %v764
        %784 = vmatpush.msra.mxu0 %v763
        %785 = vmatpush.msra.mxu0 %v762
        %786 = vmatpush.msra.mxu0 %v761
        %787 = vmatmul.f32.gmra.mxu0 %v769
        %v788 = vpop.f32.mrf.mxu0
        %v789 = vadd.f32 0.0, %v788
        %790 = vdwg.mxu0
        %791 = vst [vmem:[%s242] sm:$0x1] %v789
        %s792 = sand.u32 %s119, 1
        %s793 = scalar_lea.sflag [#allocation5], %s792
        %s794 = sand.u32 %s119, 1
        %s795 = scalar_lea.vmem [#allocation9], %s794
        // Predicated region
        $region49: #{tpu_custom_call.1} parent=35 // pred_check
          %p796 = pneg %p129
        $region50: #{tpu_custom_call.1} parent=35 // pred_check_branch
          %798 = sbr.rel (%p796) target = $region52
        $region51: #{tpu_custom_call.1} parent=35 // pred_region
          %800 = vsyncadd %s793, 0
          %s801 = scalar_lea.hbm %s4, %s22
          %s803 = sshll.u32 %s795, 4
          %s804 = int_to_ptr.vmem [resolvable:$true] %s803
          %s805 = sshll.u32 %s801, 4
          %s806 = int_to_ptr.hbm [resolvable:$true] %s805
          %808 = dma.vmem_to_hbm [thread:$0]  %s804, 16, %s806, %s793
        $region52: #{tpu_custom_call.1} parent=35 // pred_fallthru
          _
      $region36: #{tpu_custom_call.1} parent=5 // pred_fallthru
        _
      %p809 = scmp.le.s32.totalorder 2, %s17
      // Predicated region
      $region53: #{tpu_custom_call.1} parent=5 // pred_check
        %p810 = pneg %p809
      $region54: #{tpu_custom_call.1} parent=5 // pred_check_branch
        %812 = sbr.rel (%p810) target = $region56
      $region55: #{tpu_custom_call.1} parent=5 // pred_region
        %s813 = ssub.s32 %s17, 2
        // Predicated region
        $region57: #{tpu_custom_call.1} parent=55 // pred_check
          %p814 = pneg %p135
        $region58: #{tpu_custom_call.1} parent=55 // pred_check_branch
          %816 = sbr.rel (%p814) target = $region60
        $region59: #{tpu_custom_call.1} parent=55 // pred_region
          %s817 = sand.u32 %s120, 1
          %s818 = scalar_lea.sflag [#allocation5], %s817
          %s819 = sand.u32 %s120, 1
          %s820 = scalar_lea.vmem [#allocation9], %s819
          %822 = dma.done %s818, 16
        $region60: #{tpu_custom_call.1} parent=55 // pred_fallthru
          _
      $region56: #{tpu_custom_call.1} parent=5 // pred_fallthru
        _
    $region6: #{tpu_custom_call.1} parent=1 // loop_footer
      %s21 = sadd.s32 1, %s17
    $region7: #{tpu_custom_call.1} parent=1 // loop_footer_branch
      %16 = sbr.rel target = $region3
    $region8: #{tpu_custom_call.1} parent=1 // loop_exit
      _
    %823 = vsyncpa [#allocation4], 1
    %s824 = scalar_lea.sflag [#allocation4], 1
    %825 = vsyncpa %s824, 1
    %826 = vsyncpa [#allocation7], 1
    %827 = vsyncpa [#allocation5], 1
    %s828 = scalar_lea.sflag [#allocation5], 1
    %829 = vsyncpa %s828, 1

</llo_original>
